<compile_context>
chip_gen: v6e
topology: v6e:2x2x1
jax: 0.10.0
libtpu: 0.0.40
codegen_flags: <defaults>
</compile_context>

<pallas_src>
import math

import jax
import jax.numpy as jnp
from jax import lax
from jax.experimental import pallas as pl
from jax.experimental.pallas import tpu as pltpu

NEG_SLOPE = 0.2  # nn.LeakyReLU(0.2)


def _leaky(x):
    return jnp.maximum(x, NEG_SLOPE * x)


# ------------------------------ fused kernel ------------------------------

def _make_fused_kernel(inv_cout, inv_n):
    """Per-batch fused kernel: avgpool -> fc/connect -> static GCN -> dynamic adj
    -> dynamic GCN -> out2 -> per-batch loss norms.  Everything stays on-chip."""

    def kernel(fm_ref, inp_ref, sadj_ref, sw_ref, cw1_ref, cw2_ref, cb_ref,
               dw_ref, fcw_ref, fcb_ref, conw_ref, conb_ref, out_ref):
        # --- AdaptiveAvgPool2d((1,1)) + flatten; fm is (H*W, F): lane-dense reduce ---
        feat = jnp.mean(fm_ref[...], axis=0, keepdims=True)                       # (1, F)

        # --- out1 = fc(feat); connect_vec = connect(feat) ---
        out1 = jnp.dot(feat, fcw_ref[...],
                       preferred_element_type=jnp.float32) + fcb_ref[...]         # (1, Ncls)
        cv = jnp.dot(feat, conw_ref[...],
                     preferred_element_type=jnp.float32) + conb_ref[...]          # (1, Cin)

        # --- static GCN + residual: x1 = x + LeakyReLU(gen_adj(A) @ x) @ W_static ---
        # gen_adj(A) @ X == d * (A^T @ (d * X)); only the 16x16 A is transposed.
        x0 = inp_ref[...]                                                          # (N, Cin)
        a = sadj_ref[...]                                                          # (N, N)
        d = lax.rsqrt(jnp.sum(a, axis=1, keepdims=True))                           # (N, 1)
        h = d * jnp.dot(a.T, d * x0, preferred_element_type=jnp.float32)           # (N, Cin)
        x1 = x0 + jnp.dot(_leaky(h), sw_ref[...], preferred_element_type=jnp.float32)

        # --- dynamic adjacency: Conv1d(2C->N, k=1) over cat(connect_vec, x1), sigmoid
        t1 = jnp.sum(cw1_ref[...] * cv, axis=1, keepdims=True)                     # (N, 1)
        t2 = lax.dot_general(cw2_ref[...], x1, (((1,), (1,)), ((), ())),
                             preferred_element_type=jnp.float32)                   # (N, N)
        dyn = jax.nn.sigmoid(t1 + t2 + cb_ref[...])                                # (N, N)

        # --- dynamic GCN: z = LeakyReLU(LeakyReLU(gen_adjs(dyn) @ x1) @ W_dynamic) ---
        d2 = lax.rsqrt(jnp.sum(dyn, axis=1, keepdims=True))                        # (N, 1)
        h2 = d2 * jnp.dot(dyn.T, d2 * x1, preferred_element_type=jnp.float32)      # (N, Cin)
        z = _leaky(jnp.dot(_leaky(h2), dw_ref[...],
                           preferred_element_type=jnp.float32))                    # (N, Cout)

        # --- out2 = (z @ feat) / Cout -- contract the Cout axes, no transpose ---
        out2 = lax.dot_general(feat, z, (((1,), (1,)), ((), ())),
                               preferred_element_type=jnp.float32) * inv_cout      # (1, N)

        # --- per-batch loss terms (dyn_adj never leaves VMEM) ---
        # prob: || out1 - (out1 @ dyn) / N ||_2
        transformed = jnp.dot(out1, dyn, preferred_element_type=jnp.float32) * inv_n
        pdiff = out1 - transformed
        prob_norm = jnp.sqrt(jnp.sum(pdiff * pdiff, axis=1, keepdims=True))        # (1, 1)
        # gap: || dyn - static_adj ||_F
        gdiff = dyn - a
        gap_norm = jnp.sqrt(jnp.sum(jnp.sum(gdiff * gdiff, axis=1, keepdims=True),
                                    axis=0, keepdims=True))                        # (1, 1)
        col = lax.broadcasted_iota(jnp.int32, out1.shape, 1)
        loss_row = (jnp.where(col == 0, prob_norm, 0.0)
                    + jnp.where(col == 1, gap_norm, 0.0))                          # (1, Ncls)

        # pack out1 / out2 / loss terms into one output block (single writeback)
        out_ref[...] = jnp.concatenate([out1, out2, loss_row], axis=0)             # (3, Ncls)

    return kernel


# ------------------------------ full forward ------------------------------

def connect_add_standard_gcn_forward(feat_map, inp, params, *, prob=False, gap=False):
    """CONNECT_ADD_STANDARD_GCN.forward from the layer4 feature map onward.

    feat_map: (B, feat_dim, H, W)  NCHW backbone output
    inp:      (B, num_classes, in_features)  word-embedding input to the D-GCN
    returns (out1, out2, dynamic_adj_loss)
    """
    B, F, H, W = feat_map.shape
    _, N, Cin = inp.shape
    Ncls = params["fc_w"].shape[1]
    Cout = params["dynamic_w"].shape[1]
    assert Ncls == N, "num_nodes must equal num_classes"
    assert F == Cout, "out_features must equal backbone feat_dim for the final z@feat matmul"

    hw = H * W
    # NCHW -> (B, H*W, C): C on the 128-lane axis for the in-kernel avgpool.
    fm = feat_map.reshape(B, F, hw).transpose(0, 2, 1)

    cw1 = params["co_w"][:, :Cin]           # applies to connect_vec (cat order (cv, x))
    cw2 = params["co_w"][:, Cin:]           # applies to x1
    cb = params["co_b"].reshape(N, 1)
    fcb = params["fc_b"].reshape(1, Ncls)
    conb = params["connect_b"].reshape(1, Cin)

    kernel = _make_fused_kernel(1.0 / Cout, 1.0 / Ncls)

    def full(shape):
        return pl.BlockSpec(shape, lambda b: (0,) * len(shape))

    packed = pl.pallas_call(
        kernel,
        out_shape=jax.ShapeDtypeStruct((B, 3, Ncls), jnp.float32),
        grid=(B,),
        in_specs=[
            pl.BlockSpec((None, hw, F), lambda b: (b, 0, 0)),      # feature-map slab
            pl.BlockSpec((None, N, Cin), lambda b: (b, 0, 0)),     # inp (label embeddings)
            full((N, N)),        # static_adj
            full((Cin, Cin)),    # static_weight
            full((N, Cin)),      # co_w[:, :Cin]
            full((N, Cin)),      # co_w[:, Cin:]
            full((N, 1)),        # co_b
            full((Cin, Cout)),   # dynamic_weight
            full((F, Ncls)),     # fc_w
            full((1, Ncls)),     # fc_b
            full((F, Cin)),      # connect_w
            full((1, Cin)),      # connect_b
        ],
        out_specs=pl.BlockSpec((None, 3, Ncls), lambda b: (b, 0, 0)),
        compiler_params=pltpu.CompilerParams(dimension_semantics=("parallel",)),
    )(fm, inp, params["static_adj"], params["static_w"], cw1, cw2, cb,
      params["dynamic_w"], params["fc_w"], fcb, params["connect_w"], conb)

    out1 = packed[:, 0, :]
    out2 = packed[:, 1, :]

    dynamic_adj_loss = jnp.zeros((), jnp.float32)
    if prob:
        dynamic_adj_loss = dynamic_adj_loss + jnp.sum(packed[:, 2, 0])
    if gap:
        dynamic_adj_loss = dynamic_adj_loss + jnp.sum(packed[:, 2, 1]) / Ncls

    return out1, out2, dynamic_adj_loss


# --------------------------- pure-JAX reference ---------------------------

def _reference_forward(feat_map, inp, params, *, prob=False, gap=False):
    """Direct transliteration of the PyTorch forward (for correctness checks)."""
    B = feat_map.shape[0]
    N = inp.shape[1]
    Cin = inp.shape[2]
    feat = jnp.mean(feat_map, axis=(2, 3))
    out1 = feat @ params["fc_w"] + params["fc_b"]
    cv = feat @ params["connect_w"] + params["connect_b"]

    def gen_adj(a):
        d = jnp.power(jnp.sum(a, axis=1), -0.5)
        dm = jnp.diag(d)
        return (a @ dm).T @ dm

    def leaky(x):
        return jnp.where(x >= 0, x, NEG_SLOPE * x)

    adj_n = gen_adj(params["static_adj"])
    x1 = inp + leaky(jnp.einsum("ij,bjc->bic", adj_n, inp)) @ params["static_w"]

    w1 = params["co_w"][:, :Cin]
    w2 = params["co_w"][:, Cin:]
    t1 = cv @ w1.T                                                 # (B, N)
    t2 = jnp.einsum("jc,bnc->bjn", w2, x1)                         # (B, N, N)
    dyn = jax.nn.sigmoid(t1[:, :, None] + t2 + params["co_b"][None, :, None])

    adjs = jax.vmap(gen_adj)(dyn)
    h = leaky(jnp.einsum("bij,bjc->bic", adjs, x1))
    z = leaky(h @ params["dynamic_w"])                             # (B, N, Cout)
    out2 = jnp.einsum("bnc,bc->bn", z, feat) / z.shape[2]

    loss = jnp.zeros((), jnp.float32)
    if prob:
        transformed = jnp.einsum("bj,bjn->bn", out1, dyn) / N
        loss = loss + jnp.sum(jnp.sqrt(jnp.sum((out1 - transformed) ** 2, axis=1)))
    if gap:
        diff = (dyn - params["static_adj"][None]).reshape(B, -1)
        loss = loss + jnp.sum(jnp.sqrt(jnp.sum(diff ** 2, axis=1))) / N
    return out1, out2, loss


# ---------------------------------- main ----------------------------------

if __name__ == "__main__":
    # Small shapes consistent with the module: num_classes=16, in_features=64,
    # out_features == feat_dim == 256 (required for the final z @ feat matmul).
    B, Ncls, Cin, Cout, H, W = 2, 16, 64, 256, 4, 4
    feat_dim = Cout

    key = jax.random.PRNGKey(0)
    ks = jax.random.split(key, 11)

    feat_map = jax.random.normal(ks[0], (B, feat_dim, H, W), jnp.float32)   # layer4 output
    inp = jax.random.normal(ks[1], (B, Ncls, Cin), jnp.float32)             # label embeddings

    s_std = 1.0 / math.sqrt(Cin)
    d_std = 1.0 / math.sqrt(Cout)
    f_std = 1.0 / math.sqrt(feat_dim)
    params = {
        # adjList (positive entries so rowsum^-0.5 is finite), constraint=False
        "static_adj": jax.random.uniform(ks[2], (Ncls, Ncls), jnp.float32, 0.05, 1.0),
        "static_w": jax.random.uniform(ks[3], (Cin, Cin), jnp.float32, -s_std, s_std),
        "dynamic_w": jax.random.uniform(ks[4], (Cin, Cout), jnp.float32, -d_std, d_std),
        # Conv1d(2*in_features, num_classes, 1): weight (Ncls, 2*Cin), bias (Ncls,)
        "co_w": jax.random.uniform(ks[5], (Ncls, 2 * Cin), jnp.float32, -0.05, 0.05),
        "co_b": jax.random.uniform(ks[6], (Ncls,), jnp.float32, -0.05, 0.05),
        # Linear layers, weights stored pre-transposed (in, out)
        "fc_w": jax.random.uniform(ks[7], (feat_dim, Ncls), jnp.float32, -f_std, f_std),
        "fc_b": jax.random.uniform(ks[9], (Ncls,), jnp.float32, -0.05, 0.05),
        "connect_w": jax.random.uniform(ks[8], (feat_dim, Cin), jnp.float32, -f_std, f_std),
        "connect_b": jax.random.uniform(ks[10], (Cin,), jnp.float32, -0.05, 0.05),
    }

    for prob, gap in ((False, False), (True, True)):
        out1, out2, loss = connect_add_standard_gcn_forward(
            feat_map, inp, params, prob=prob, gap=gap)
        jax.block_until_ready((out1, out2, loss))
        r1, r2, rl = _reference_forward(feat_map, inp, params, prob=prob, gap=gap)

        assert out1.shape == (B, Ncls) and out2.shape == (B, Ncls) and loss.shape == ()
        assert bool(jnp.all(jnp.isfinite(out1))) and bool(jnp.all(jnp.isfinite(out2)))
        assert bool(jnp.allclose(out1, r1, rtol=2e-3, atol=2e-3)), "out1 mismatch vs reference"
        assert bool(jnp.allclose(out2, r2, rtol=2e-3, atol=2e-3)), "out2 mismatch vs reference"
        assert bool(jnp.allclose(loss, rl, rtol=2e-3, atol=2e-3)), "loss mismatch vs reference"

    print("KERNEL_OK")
</pallas_src>

<mosaic_0001>
module attributes {stable_mosaic.version = 11 : i64} {
  func.func @kernel(%arg0: i32, %arg1: memref<1x16x256xf32, #tpu.memory_space<vmem>>, %arg2: memref<1x16x64xf32, #tpu.memory_space<vmem>>, %arg3: memref<16x16xf32, #tpu.memory_space<vmem>>, %arg4: memref<64x64xf32, #tpu.memory_space<vmem>>, %arg5: memref<16x64xf32, #tpu.memory_space<vmem>>, %arg6: memref<16x64xf32, #tpu.memory_space<vmem>>, %arg7: memref<16x1xf32, #tpu.memory_space<vmem>>, %arg8: memref<64x256xf32, #tpu.memory_space<vmem>>, %arg9: memref<256x16xf32, #tpu.memory_space<vmem>>, %arg10: memref<1x16xf32, #tpu.memory_space<vmem>>, %arg11: memref<256x64xf32, #tpu.memory_space<vmem>>, %arg12: memref<1x64xf32, #tpu.memory_space<vmem>>, %arg13: memref<1x3x16xf32, #tpu.memory_space<vmem>>) attributes {dimension_semantics = [#tpu.dimension_semantics<parallel>], iteration_bounds = array<i64: 2>, scalar_prefetch = 0 : i64, scratch_operands = 0 : i64, tpu.core_type = #tpu.core_type<tc>, window_params = [{transform_indices = @transform_0, window_bounds = array<i64: 1, 16, 256>}, {transform_indices = @transform_1, window_bounds = array<i64: 1, 16, 64>}, {pipeline_mode = #tpu.pipeline_mode<synchronous>, transform_indices = @transform_2, window_bounds = array<i64: 16, 16>}, {pipeline_mode = #tpu.pipeline_mode<synchronous>, transform_indices = @transform_3, window_bounds = array<i64: 64, 64>}, {pipeline_mode = #tpu.pipeline_mode<synchronous>, transform_indices = @transform_4, window_bounds = array<i64: 16, 64>}, {pipeline_mode = #tpu.pipeline_mode<synchronous>, transform_indices = @transform_5, window_bounds = array<i64: 16, 64>}, {pipeline_mode = #tpu.pipeline_mode<synchronous>, transform_indices = @transform_6, window_bounds = array<i64: 16, 1>}, {pipeline_mode = #tpu.pipeline_mode<synchronous>, transform_indices = @transform_7, window_bounds = array<i64: 64, 256>}, {pipeline_mode = #tpu.pipeline_mode<synchronous>, transform_indices = @transform_8, window_bounds = array<i64: 256, 16>}, {pipeline_mode = #tpu.pipeline_mode<synchronous>, transform_indices = @transform_9, window_bounds = array<i64: 1, 16>}, {pipeline_mode = #tpu.pipeline_mode<synchronous>, transform_indices = @transform_10, window_bounds = array<i64: 256, 64>}, {pipeline_mode = #tpu.pipeline_mode<synchronous>, transform_indices = @transform_11, window_bounds = array<i64: 1, 64>}, {transform_indices = @transform_12, window_bounds = array<i64: 1, 3, 16>}]} {
    %c0 = arith.constant 0 : index
    %c0_0 = arith.constant 0 : index
    %c0_1 = arith.constant 0 : index
    %0 = vector.load %arg1[%c0, %c0_0, %c0_1] : memref<1x16x256xf32, #tpu.memory_space<vmem>>, vector<1x16x256xf32>
    %1 = vector.shape_cast %0 : vector<1x16x256xf32> to vector<16x256xf32>
    %cst = arith.constant dense<0.000000e+00> : vector<256xf32>
    %2 = vector.multi_reduction <add>, %1, %cst [0] : vector<16x256xf32> to vector<256xf32>
    %3 = vector.shape_cast %2 : vector<256xf32> to vector<1x256xf32>
    %cst_2 = arith.constant 1.600000e+01 : f32
    %4 = vector.broadcast %cst_2 : f32 to vector<1x256xf32>
    %5 = arith.divf %3, %4 : vector<1x256xf32>
    %c0_3 = arith.constant 0 : index
    %c0_4 = arith.constant 0 : index
    %6 = vector.load %arg9[%c0_3, %c0_4] : memref<256x16xf32, #tpu.memory_space<vmem>>, vector<256x16xf32>
    %cst_5 = arith.constant dense<0.000000e+00> : vector<1x16xf32>
    %7 = tpu.matmul %5, %6, %cst_5 {dimension_numbers = #tpu.dot_dimension_numbers<[1], [0], [0], [1], [0, 0, 1, 1], [], []>} : vector<1x256xf32>, vector<256x16xf32>, vector<1x16xf32> -> vector<1x16xf32>
    %c0_6 = arith.constant 0 : index
    %c0_7 = arith.constant 0 : index
    %8 = vector.load %arg10[%c0_6, %c0_7] : memref<1x16xf32, #tpu.memory_space<vmem>>, vector<1x16xf32>
    %9 = arith.addf %7, %8 : vector<1x16xf32>
    %c0_8 = arith.constant 0 : index
    %c0_9 = arith.constant 0 : index
    %10 = vector.load %arg11[%c0_8, %c0_9] : memref<256x64xf32, #tpu.memory_space<vmem>>, vector<256x64xf32>
    %cst_10 = arith.constant dense<0.000000e+00> : vector<1x64xf32>
    %11 = tpu.matmul %5, %10, %cst_10 {dimension_numbers = #tpu.dot_dimension_numbers<[1], [0], [0], [1], [0, 0, 1, 1], [], []>} : vector<1x256xf32>, vector<256x64xf32>, vector<1x64xf32> -> vector<1x64xf32>
    %c0_11 = arith.constant 0 : index
    %c0_12 = arith.constant 0 : index
    %12 = vector.load %arg12[%c0_11, %c0_12] : memref<1x64xf32, #tpu.memory_space<vmem>>, vector<1x64xf32>
    %13 = arith.addf %11, %12 : vector<1x64xf32>
    %c0_13 = arith.constant 0 : index
    %c0_14 = arith.constant 0 : index
    %c0_15 = arith.constant 0 : index
    %14 = vector.load %arg2[%c0_13, %c0_14, %c0_15] : memref<1x16x64xf32, #tpu.memory_space<vmem>>, vector<1x16x64xf32>
    %15 = vector.shape_cast %14 : vector<1x16x64xf32> to vector<16x64xf32>
    %c0_16 = arith.constant 0 : index
    %c0_17 = arith.constant 0 : index
    %16 = vector.load %arg3[%c0_16, %c0_17] : memref<16x16xf32, #tpu.memory_space<vmem>>, vector<16x16xf32>
    %cst_18 = arith.constant dense<0.000000e+00> : vector<16xf32>
    %17 = vector.multi_reduction <add>, %16, %cst_18 [1] : vector<16x16xf32> to vector<16xf32>
    %18 = vector.shape_cast %17 : vector<16xf32> to vector<16x1xf32>
    %19 = math.rsqrt %18 : vector<16x1xf32>
    %20 = tpu.transpose %16, [1, 0] : vector<16x16xf32> -> vector<16x16xf32>
    %21 = vector.broadcast %19 : vector<16x1xf32> to vector<16x64xf32>
    %22 = arith.mulf %21, %15 : vector<16x64xf32>
    %cst_19 = arith.constant dense<0.000000e+00> : vector<16x64xf32>
    %23 = tpu.matmul %20, %22, %cst_19 {dimension_numbers = #tpu.dot_dimension_numbers<[1], [0], [0], [1], [0, 0, 1, 1], [], []>} : vector<16x16xf32>, vector<16x64xf32>, vector<16x64xf32> -> vector<16x64xf32>
    %24 = vector.broadcast %19 : vector<16x1xf32> to vector<16x64xf32>
    %25 = arith.mulf %24, %23 : vector<16x64xf32>
    %cst_20 = arith.constant 2.000000e-01 : f32
    %26 = vector.broadcast %cst_20 : f32 to vector<16x64xf32>
    %27 = arith.mulf %26, %25 : vector<16x64xf32>
    %28 = arith.maximumf %25, %27 : vector<16x64xf32>
    %c0_21 = arith.constant 0 : index
    %c0_22 = arith.constant 0 : index
    %29 = vector.load %arg4[%c0_21, %c0_22] : memref<64x64xf32, #tpu.memory_space<vmem>>, vector<64x64xf32>
    %cst_23 = arith.constant dense<0.000000e+00> : vector<16x64xf32>
    %30 = tpu.matmul %28, %29, %cst_23 {dimension_numbers = #tpu.dot_dimension_numbers<[1], [0], [0], [1], [0, 0, 1, 1], [], []>} : vector<16x64xf32>, vector<64x64xf32>, vector<16x64xf32> -> vector<16x64xf32>
    %31 = arith.addf %15, %30 : vector<16x64xf32>
    %c0_24 = arith.constant 0 : index
    %c0_25 = arith.constant 0 : index
    %32 = vector.load %arg5[%c0_24, %c0_25] : memref<16x64xf32, #tpu.memory_space<vmem>>, vector<16x64xf32>
    %33 = vector.broadcast %13 : vector<1x64xf32> to vector<16x64xf32>
    %34 = arith.mulf %32, %33 : vector<16x64xf32>
    %cst_26 = arith.constant dense<0.000000e+00> : vector<16xf32>
    %35 = vector.multi_reduction <add>, %34, %cst_26 [1] : vector<16x64xf32> to vector<16xf32>
    %36 = vector.shape_cast %35 : vector<16xf32> to vector<16x1xf32>
    %c0_27 = arith.constant 0 : index
    %c0_28 = arith.constant 0 : index
    %37 = vector.load %arg6[%c0_27, %c0_28] : memref<16x64xf32, #tpu.memory_space<vmem>>, vector<16x64xf32>
    %cst_29 = arith.constant dense<0.000000e+00> : vector<16x16xf32>
    %38 = tpu.matmul %37, %31, %cst_29 {dimension_numbers = #tpu.dot_dimension_numbers<[1], [1], [0], [0], [0, 0, 1, 0], [], []>} : vector<16x64xf32>, vector<16x64xf32>, vector<16x16xf32> -> vector<16x16xf32>
    %39 = vector.broadcast %36 : vector<16x1xf32> to vector<16x16xf32>
    %40 = arith.addf %39, %38 : vector<16x16xf32>
    %c0_30 = arith.constant 0 : index
    %c0_31 = arith.constant 0 : index
    %41 = vector.load %arg7[%c0_30, %c0_31] : memref<16x1xf32, #tpu.memory_space<vmem>>, vector<16x1xf32>
    %42 = vector.broadcast %41 : vector<16x1xf32> to vector<16x16xf32>
    %43 = arith.addf %40, %42 : vector<16x16xf32>
    %44 = arith.negf %43 : vector<16x16xf32>
    %45 = math.exp %44 : vector<16x16xf32>
    %cst_32 = arith.constant 1.000000e+00 : f32
    %46 = vector.broadcast %cst_32 : f32 to vector<16x16xf32>
    %47 = arith.addf %46, %45 : vector<16x16xf32>
    %48 = arith.divf %46, %47 : vector<16x16xf32>
    %cst_33 = arith.constant dense<0.000000e+00> : vector<16xf32>
    %49 = vector.multi_reduction <add>, %48, %cst_33 [1] : vector<16x16xf32> to vector<16xf32>
    %50 = vector.shape_cast %49 : vector<16xf32> to vector<16x1xf32>
    %51 = math.rsqrt %50 : vector<16x1xf32>
    %52 = tpu.transpose %48, [1, 0] : vector<16x16xf32> -> vector<16x16xf32>
    %53 = vector.broadcast %51 : vector<16x1xf32> to vector<16x64xf32>
    %54 = arith.mulf %53, %31 : vector<16x64xf32>
    %cst_34 = arith.constant dense<0.000000e+00> : vector<16x64xf32>
    %55 = tpu.matmul %52, %54, %cst_34 {dimension_numbers = #tpu.dot_dimension_numbers<[1], [0], [0], [1], [0, 0, 1, 1], [], []>} : vector<16x16xf32>, vector<16x64xf32>, vector<16x64xf32> -> vector<16x64xf32>
    %56 = vector.broadcast %51 : vector<16x1xf32> to vector<16x64xf32>
    %57 = arith.mulf %56, %55 : vector<16x64xf32>
    %cst_35 = arith.constant 2.000000e-01 : f32
    %58 = vector.broadcast %cst_35 : f32 to vector<16x64xf32>
    %59 = arith.mulf %58, %57 : vector<16x64xf32>
    %60 = arith.maximumf %57, %59 : vector<16x64xf32>
    %c0_36 = arith.constant 0 : index
    %c0_37 = arith.constant 0 : index
    %61 = vector.load %arg8[%c0_36, %c0_37] : memref<64x256xf32, #tpu.memory_space<vmem>>, vector<64x256xf32>
    %cst_38 = arith.constant dense<0.000000e+00> : vector<16x256xf32>
    %62 = tpu.matmul %60, %61, %cst_38 {dimension_numbers = #tpu.dot_dimension_numbers<[1], [0], [0], [1], [0, 0, 1, 1], [], []>} : vector<16x64xf32>, vector<64x256xf32>, vector<16x256xf32> -> vector<16x256xf32>
    %cst_39 = arith.constant 2.000000e-01 : f32
    %63 = vector.broadcast %cst_39 : f32 to vector<16x256xf32>
    %64 = arith.mulf %63, %62 : vector<16x256xf32>
    %65 = arith.maximumf %62, %64 : vector<16x256xf32>
    %cst_40 = arith.constant dense<0.000000e+00> : vector<1x16xf32>
    %66 = tpu.matmul %5, %65, %cst_40 {dimension_numbers = #tpu.dot_dimension_numbers<[1], [1], [0], [0], [0, 0, 1, 0], [], []>} : vector<1x256xf32>, vector<16x256xf32>, vector<1x16xf32> -> vector<1x16xf32>
    %cst_41 = arith.constant 3.906250e-03 : f32
    %67 = vector.broadcast %cst_41 : f32 to vector<1x16xf32>
    %68 = arith.mulf %66, %67 : vector<1x16xf32>
    %cst_42 = arith.constant dense<0.000000e+00> : vector<1x16xf32>
    %69 = tpu.matmul %9, %48, %cst_42 {dimension_numbers = #tpu.dot_dimension_numbers<[1], [0], [0], [1], [0, 0, 1, 1], [], []>} : vector<1x16xf32>, vector<16x16xf32>, vector<1x16xf32> -> vector<1x16xf32>
    %cst_43 = arith.constant 6.250000e-02 : f32
    %70 = vector.broadcast %cst_43 : f32 to vector<1x16xf32>
    %71 = arith.mulf %69, %70 : vector<1x16xf32>
    %72 = arith.subf %9, %71 : vector<1x16xf32>
    %73 = arith.mulf %72, %72 : vector<1x16xf32>
    %cst_44 = arith.constant dense<0.000000e+00> : vector<1xf32>
    %74 = vector.multi_reduction <add>, %73, %cst_44 [1] : vector<1x16xf32> to vector<1xf32>
    %75 = vector.shape_cast %74 : vector<1xf32> to vector<1x1xf32>
    %76 = math.sqrt %75 : vector<1x1xf32>
    %77 = arith.subf %48, %16 : vector<16x16xf32>
    %78 = arith.mulf %77, %77 : vector<16x16xf32>
    %cst_45 = arith.constant dense<0.000000e+00> : vector<16xf32>
    %79 = vector.multi_reduction <add>, %78, %cst_45 [1] : vector<16x16xf32> to vector<16xf32>
    %80 = vector.shape_cast %79 : vector<16xf32> to vector<16x1xf32>
    %cst_46 = arith.constant dense<0.000000e+00> : vector<1xf32>
    %81 = vector.multi_reduction <add>, %80, %cst_46 [0] : vector<16x1xf32> to vector<1xf32>
    %82 = vector.shape_cast %81 : vector<1xf32> to vector<1x1xf32>
    %83 = math.sqrt %82 : vector<1x1xf32>
    %84 = tpu.iota {dimensions = array<i32: 1>} : vector<1x16xi32>
    %c0_i32 = arith.constant 0 : i32
    %85 = vector.broadcast %c0_i32 : i32 to vector<1x16xi32>
    %86 = arith.cmpi eq, %84, %85 : vector<1x16xi32>
    %cst_47 = arith.constant 0.000000e+00 : f32
    %87 = vector.shape_cast %76 : vector<1x1xf32> to vector<1x1xf32>
    %88 = vector.broadcast %87 : vector<1x1xf32> to vector<1x16xf32>
    %89 = vector.broadcast %cst_47 : f32 to vector<1x16xf32>
    %90 = arith.select %86, %88, %89 : vector<1x16xi1>, vector<1x16xf32>
    %c1_i32 = arith.constant 1 : i32
    %91 = vector.broadcast %c1_i32 : i32 to vector<1x16xi32>
    %92 = arith.cmpi eq, %84, %91 : vector<1x16xi32>
    %cst_48 = arith.constant 0.000000e+00 : f32
    %93 = vector.shape_cast %83 : vector<1x1xf32> to vector<1x1xf32>
    %94 = vector.broadcast %93 : vector<1x1xf32> to vector<1x16xf32>
    %95 = vector.broadcast %cst_48 : f32 to vector<1x16xf32>
    %96 = arith.select %92, %94, %95 : vector<1x16xi1>, vector<1x16xf32>
    %97 = arith.addf %90, %96 : vector<1x16xf32>
    %98 = tpu.concatenate %9, %68, %97 in 0 : vector<1x16xf32>, vector<1x16xf32>, vector<1x16xf32> -> vector<3x16xf32>
    %c0_49 = arith.constant 0 : index
    %c0_50 = arith.constant 0 : index
    %c0_51 = arith.constant 0 : index
    %99 = vector.load %arg13[%c0_49, %c0_50, %c0_51] : memref<1x3x16xf32, #tpu.memory_space<vmem>>, vector<1x3x16xf32>
    %100 = vector.shape_cast %99 : vector<1x3x16xf32> to vector<3x16xf32>
    %101 = vector.shape_cast %98 : vector<3x16xf32> to vector<1x3x16xf32>
    tpu.vector_store %arg13[%c0_49, %c0_50, %c0_51], %101 {strides = array<i32>} : memref<1x3x16xf32, #tpu.memory_space<vmem>>, vector<1x3x16xf32>,
    return
  }
  func.func @transform_0(%arg0: i32) -> (i32, i32, i32) {
    %c0_i32 = arith.constant 0 : i32
    %c0_i32_0 = arith.constant 0 : i32
    %c0_i32_1 = arith.constant 0 : i32
    return %arg0, %c0_i32, %c0_i32_0 : i32, i32, i32
  }
  func.func @transform_1(%arg0: i32) -> (i32, i32, i32) {
    %c0_i32 = arith.constant 0 : i32
    %c0_i32_0 = arith.constant 0 : i32
    %c0_i32_1 = arith.constant 0 : i32
    return %arg0, %c0_i32, %c0_i32_0 : i32, i32, i32
  }
  func.func @transform_2(%arg0: i32) -> (i32, i32) {
    %c0_i32 = arith.constant 0 : i32
    %c0_i32_0 = arith.constant 0 : i32
    %c0_i32_1 = arith.constant 0 : i32
    return %c0_i32, %c0_i32_0 : i32, i32
  }
  func.func @transform_3(%arg0: i32) -> (i32, i32) {
    %c0_i32 = arith.constant 0 : i32
    %c0_i32_0 = arith.constant 0 : i32
    %c0_i32_1 = arith.constant 0 : i32
    return %c0_i32, %c0_i32_0 : i32, i32
  }
  func.func @transform_4(%arg0: i32) -> (i32, i32) {
    %c0_i32 = arith.constant 0 : i32
    %c0_i32_0 = arith.constant 0 : i32
    %c0_i32_1 = arith.constant 0 : i32
    return %c0_i32, %c0_i32_0 : i32, i32
  }
  func.func @transform_5(%arg0: i32) -> (i32, i32) {
    %c0_i32 = arith.constant 0 : i32
    %c0_i32_0 = arith.constant 0 : i32
    %c0_i32_1 = arith.constant 0 : i32
    return %c0_i32, %c0_i32_0 : i32, i32
  }
  func.func @transform_6(%arg0: i32) -> (i32, i32) {
    %c0_i32 = arith.constant 0 : i32
    %c0_i32_0 = arith.constant 0 : i32
    %c0_i32_1 = arith.constant 0 : i32
    return %c0_i32, %c0_i32_0 : i32, i32
  }
  func.func @transform_7(%arg0: i32) -> (i32, i32) {
    %c0_i32 = arith.constant 0 : i32
    %c0_i32_0 = arith.constant 0 : i32
    %c0_i32_1 = arith.constant 0 : i32
    return %c0_i32, %c0_i32_0 : i32, i32
  }
  func.func @transform_8(%arg0: i32) -> (i32, i32) {
    %c0_i32 = arith.constant 0 : i32
    %c0_i32_0 = arith.constant 0 : i32
    %c0_i32_1 = arith.constant 0 : i32
    return %c0_i32, %c0_i32_0 : i32, i32
  }
  func.func @transform_9(%arg0: i32) -> (i32, i32) {
    %c0_i32 = arith.constant 0 : i32
    %c0_i32_0 = arith.constant 0 : i32
    %c0_i32_1 = arith.constant 0 : i32
    return %c0_i32, %c0_i32_0 : i32, i32
  }
  func.func @transform_10(%arg0: i32) -> (i32, i32) {
    %c0_i32 = arith.constant 0 : i32
    %c0_i32_0 = arith.constant 0 : i32
    %c0_i32_1 = arith.constant 0 : i32
    return %c0_i32, %c0_i32_0 : i32, i32
  }
  func.func @transform_11(%arg0: i32) -> (i32, i32) {
    %c0_i32 = arith.constant 0 : i32
    %c0_i32_0 = arith.constant 0 : i32
    %c0_i32_1 = arith.constant 0 : i32
    return %c0_i32, %c0_i32_0 : i32, i32
  }
  func.func @transform_12(%arg0: i32) -> (i32, i32, i32) {
    %c0_i32 = arith.constant 0 : i32
    %c0_i32_0 = arith.constant 0 : i32
    %c0_i32_1 = arith.constant 0 : i32
    return %arg0, %c0_i32, %c0_i32_0 : i32, i32, i32
  }
}

</mosaic_0001>

<llo_original>
// kernel: tpu_custom_call.1
$region0: #{tpu_custom_call.1}
  #allocation0 [shape = 'u32[]', space=smem, size = 0x4, offset = 0x4, fixed_abs, tag = 'smem constant byte address 0x4 - core index']
  #allocation1 [shape = 'u32[144,128]{1,0:T(1,128)}', space=vmem, size = 0x12000, scoped, tag = 'internal scratch']
  %s0 = inlined_call_operand.vmem [shape: f32[2,16,256], index: 0, kind: input, shape index: {}]
  %s1 = inlined_call_operand.vmem [shape: f32[2,16,64], index: 1, kind: input, shape index: {}]
  %s2 = inlined_call_operand.vmem [shape: f32[16,16], index: 2, kind: input, shape index: {}]
  %s3 = inlined_call_operand.vmem [shape: f32[64,64], index: 3, kind: input, shape index: {}]
  %s4 = inlined_call_operand.vmem [shape: f32[16,64], index: 4, kind: input, shape index: {}]
  %s5 = inlined_call_operand.vmem [shape: f32[16,64], index: 5, kind: input, shape index: {}]
  %s6 = inlined_call_operand.vmem [shape: f32[16,1], index: 6, kind: input, shape index: {}]
  %s7 = inlined_call_operand.vmem [shape: f32[64,256], index: 7, kind: input, shape index: {}]
  %s8 = inlined_call_operand.vmem [shape: f32[256,16], index: 8, kind: input, shape index: {}]
  %s9 = inlined_call_operand.vmem [shape: f32[1,16], index: 9, kind: input, shape index: {}]
  %s10 = inlined_call_operand.vmem [shape: f32[256,64], index: 10, kind: input, shape index: {}]
  %s11 = inlined_call_operand.vmem [shape: f32[1,64], index: 11, kind: input, shape index: {}]
  %s12 = inlined_call_operand.vmem [shape: f32[2,3,16], index: 12, kind: output, shape index: {}]
  %s13 = sld [smem:[#allocation0]]
  $region81: #{tpu_custom_call.1} parent=0
    _
  %s15 = ssub.s32 1, %s13
  %s16 = scalar_select 0, %s15, %s13
  loop: start=0, step=1, limit=4
  $region2: #{tpu_custom_call.1} parent=0 // loop_pre_header
    _
  $region3: #{tpu_custom_call.1} parent=0 // loop_header
    %s18 = sphi 0, %s22
    %p19 = scmp.ge.s32.totalorder %s18, 4
    %s28 = sphi 0, %s30
    %s31 = sphi 0, %s28
    %s32 = sphi 0, %s31
    %s48 = sphi 0, %s32
    %s54 = sphi 0, %s56
    %s57 = sphi 0, %s54
    %s58 = sphi 0, %s57
    %s74 = sphi 0, %s58
    %s78 = sphi 0, %s78
    %s80 = sphi 0, %s78
    %s81 = sphi 0, %s80
    %s95 = sphi 0, %s81
    %s99 = sphi 0, %s99
    %s101 = sphi 0, %s99
    %s102 = sphi 0, %s101
    %s116 = sphi 0, %s102
    %s120 = sphi 0, %s120
    %s122 = sphi 0, %s120
    %s123 = sphi 0, %s122
    %s137 = sphi 0, %s123
    %s141 = sphi 0, %s141
    %s143 = sphi 0, %s141
    %s144 = sphi 0, %s143
    %s158 = sphi 0, %s144
    %s162 = sphi 0, %s162
    %s164 = sphi 0, %s162
    %s165 = sphi 0, %s164
    %s179 = sphi 0, %s165
    %s183 = sphi 0, %s183
    %s185 = sphi 0, %s183
    %s186 = sphi 0, %s185
    %s200 = sphi 0, %s186
    %s204 = sphi 0, %s204
    %s206 = sphi 0, %s204
    %s207 = sphi 0, %s206
    %s221 = sphi 0, %s207
    %s225 = sphi 0, %s225
    %s227 = sphi 0, %s225
    %s228 = sphi 0, %s227
    %s242 = sphi 0, %s228
    %s246 = sphi 0, %s246
    %s248 = sphi 0, %s246
    %s249 = sphi 0, %s248
    %s263 = sphi 0, %s249
    %s267 = sphi 0, %s267
    %s269 = sphi 0, %s267
    %s270 = sphi 0, %s269
    %s284 = sphi 0, %s270
    %s290 = sphi 0, %s292
    %s293 = sphi 0, %s290
    %s294 = sphi 0, %s293
    %s310 = sphi 0, %s294
  $region4: #{tpu_custom_call.1} parent=0 // loop_header_branch
    %21 = sbr.rel (%p19) target = $region8
  $region5: #{tpu_custom_call.1} parent=0 // loop_body
    %s23 = ssub.s32 %s18, 1
    %s24 = ssub.s32 %s18, 2
    %s25 = sadd.s32 %s18, 1
    %s26 = ssub.s32 %s18, %s25
    %p27 = scmp.eq.s32.totalorder %s26, 0
    %s29 = sadd.s32 %s28, 1
    %s30 = scalar_select %p27, %s28, %s29
    %p33 = pneg %p27
    %p34 = scmp.eq.s32.totalorder %s18, 1
    %p35 = por %p33, %p34
    %p36 = scmp.ne.s32.totalorder %s28, %s31
    %p37 = scmp.eq.s32.totalorder %s18, 0
    %p38 = por %p36, %p37
    %p39 = scmp.ne.s32.totalorder %s28, %s31
    %p40 = scmp.eq.s32.totalorder %s23, 1
    %p41 = por %p39, %p40
    %p42 = scmp.ne.s32.totalorder %s31, %s32
    %p43 = scmp.eq.s32.totalorder %s23, 0
    %p44 = por %p42, %p43
    %p45 = scmp.ne.s32.totalorder %s31, %s32
    %p46 = scmp.eq.s32.totalorder %s24, 1
    %p47 = por %p45, %p46
    %p49 = scmp.ne.s32.totalorder %s32, %s48
    %p50 = scmp.eq.s32.totalorder %s24, 0
    %p51 = por %p49, %p50
    %s52 = ssub.s32 %s18, %s25
    %p53 = scmp.eq.s32.totalorder %s52, 0
    %s55 = sadd.s32 %s54, 1
    %s56 = scalar_select %p53, %s54, %s55
    %p59 = pneg %p53
    %p60 = scmp.eq.s32.totalorder %s18, 1
    %p61 = por %p59, %p60
    %p62 = scmp.ne.s32.totalorder %s54, %s57
    %p63 = scmp.eq.s32.totalorder %s18, 0
    %p64 = por %p62, %p63
    %p65 = scmp.ne.s32.totalorder %s54, %s57
    %p66 = scmp.eq.s32.totalorder %s23, 1
    %p67 = por %p65, %p66
    %p68 = scmp.ne.s32.totalorder %s57, %s58
    %p69 = scmp.eq.s32.totalorder %s23, 0
    %p70 = por %p68, %p69
    %p71 = scmp.ne.s32.totalorder %s57, %s58
    %p72 = scmp.eq.s32.totalorder %s24, 1
    %p73 = por %p71, %p72
    %p75 = scmp.ne.s32.totalorder %s58, %s74
    %p76 = scmp.eq.s32.totalorder %s24, 0
    %p77 = por %p75, %p76
    %s79 = sadd.s32 %s78, 1
    %p82 = scmp.eq.s32.totalorder %s18, 1
    %p83 = scmp.ne.s32.totalorder %s78, %s80
    %p84 = scmp.eq.s32.totalorder %s18, 0
    %p85 = por %p83, %p84
    %p86 = scmp.ne.s32.totalorder %s78, %s80
    %p87 = scmp.eq.s32.totalorder %s23, 1
    %p88 = por %p86, %p87
    %p89 = scmp.ne.s32.totalorder %s80, %s81
    %p90 = scmp.eq.s32.totalorder %s23, 0
    %p91 = por %p89, %p90
    %p92 = scmp.ne.s32.totalorder %s80, %s81
    %p93 = scmp.eq.s32.totalorder %s24, 1
    %p94 = por %p92, %p93
    %p96 = scmp.ne.s32.totalorder %s81, %s95
    %p97 = scmp.eq.s32.totalorder %s24, 0
    %p98 = por %p96, %p97
    %s100 = sadd.s32 %s99, 1
    %p103 = scmp.eq.s32.totalorder %s18, 1
    %p104 = scmp.ne.s32.totalorder %s99, %s101
    %p105 = scmp.eq.s32.totalorder %s18, 0
    %p106 = por %p104, %p105
    %p107 = scmp.ne.s32.totalorder %s99, %s101
    %p108 = scmp.eq.s32.totalorder %s23, 1
    %p109 = por %p107, %p108
    %p110 = scmp.ne.s32.totalorder %s101, %s102
    %p111 = scmp.eq.s32.totalorder %s23, 0
    %p112 = por %p110, %p111
    %p113 = scmp.ne.s32.totalorder %s101, %s102
    %p114 = scmp.eq.s32.totalorder %s24, 1
    %p115 = por %p113, %p114
    %p117 = scmp.ne.s32.totalorder %s102, %s116
    %p118 = scmp.eq.s32.totalorder %s24, 0
    %p119 = por %p117, %p118
    %s121 = sadd.s32 %s120, 1
    %p124 = scmp.eq.s32.totalorder %s18, 1
    %p125 = scmp.ne.s32.totalorder %s120, %s122
    %p126 = scmp.eq.s32.totalorder %s18, 0
    %p127 = por %p125, %p126
    %p128 = scmp.ne.s32.totalorder %s120, %s122
    %p129 = scmp.eq.s32.totalorder %s23, 1
    %p130 = por %p128, %p129
    %p131 = scmp.ne.s32.totalorder %s122, %s123
    %p132 = scmp.eq.s32.totalorder %s23, 0
    %p133 = por %p131, %p132
    %p134 = scmp.ne.s32.totalorder %s122, %s123
    %p135 = scmp.eq.s32.totalorder %s24, 1
    %p136 = por %p134, %p135
    %p138 = scmp.ne.s32.totalorder %s123, %s137
    %p139 = scmp.eq.s32.totalorder %s24, 0
    %p140 = por %p138, %p139
    %s142 = sadd.s32 %s141, 1
    %p145 = scmp.eq.s32.totalorder %s18, 1
    %p146 = scmp.ne.s32.totalorder %s141, %s143
    %p147 = scmp.eq.s32.totalorder %s18, 0
    %p148 = por %p146, %p147
    %p149 = scmp.ne.s32.totalorder %s141, %s143
    %p150 = scmp.eq.s32.totalorder %s23, 1
    %p151 = por %p149, %p150
    %p152 = scmp.ne.s32.totalorder %s143, %s144
    %p153 = scmp.eq.s32.totalorder %s23, 0
    %p154 = por %p152, %p153
    %p155 = scmp.ne.s32.totalorder %s143, %s144
    %p156 = scmp.eq.s32.totalorder %s24, 1
    %p157 = por %p155, %p156
    %p159 = scmp.ne.s32.totalorder %s144, %s158
    %p160 = scmp.eq.s32.totalorder %s24, 0
    %p161 = por %p159, %p160
    %s163 = sadd.s32 %s162, 1
    %p166 = scmp.eq.s32.totalorder %s18, 1
    %p167 = scmp.ne.s32.totalorder %s162, %s164
    %p168 = scmp.eq.s32.totalorder %s18, 0
    %p169 = por %p167, %p168
    %p170 = scmp.ne.s32.totalorder %s162, %s164
    %p171 = scmp.eq.s32.totalorder %s23, 1
    %p172 = por %p170, %p171
    %p173 = scmp.ne.s32.totalorder %s164, %s165
    %p174 = scmp.eq.s32.totalorder %s23, 0
    %p175 = por %p173, %p174
    %p176 = scmp.ne.s32.totalorder %s164, %s165
    %p177 = scmp.eq.s32.totalorder %s24, 1
    %p178 = por %p176, %p177
    %p180 = scmp.ne.s32.totalorder %s165, %s179
    %p181 = scmp.eq.s32.totalorder %s24, 0
    %p182 = por %p180, %p181
    %s184 = sadd.s32 %s183, 1
    %p187 = scmp.eq.s32.totalorder %s18, 1
    %p188 = scmp.ne.s32.totalorder %s183, %s185
    %p189 = scmp.eq.s32.totalorder %s18, 0
    %p190 = por %p188, %p189
    %p191 = scmp.ne.s32.totalorder %s183, %s185
    %p192 = scmp.eq.s32.totalorder %s23, 1
    %p193 = por %p191, %p192
    %p194 = scmp.ne.s32.totalorder %s185, %s186
    %p195 = scmp.eq.s32.totalorder %s23, 0
    %p196 = por %p194, %p195
    %p197 = scmp.ne.s32.totalorder %s185, %s186
    %p198 = scmp.eq.s32.totalorder %s24, 1
    %p199 = por %p197, %p198
    %p201 = scmp.ne.s32.totalorder %s186, %s200
    %p202 = scmp.eq.s32.totalorder %s24, 0
    %p203 = por %p201, %p202
    %s205 = sadd.s32 %s204, 1
    %p208 = scmp.eq.s32.totalorder %s18, 1
    %p209 = scmp.ne.s32.totalorder %s204, %s206
    %p210 = scmp.eq.s32.totalorder %s18, 0
    %p211 = por %p209, %p210
    %p212 = scmp.ne.s32.totalorder %s204, %s206
    %p213 = scmp.eq.s32.totalorder %s23, 1
    %p214 = por %p212, %p213
    %p215 = scmp.ne.s32.totalorder %s206, %s207
    %p216 = scmp.eq.s32.totalorder %s23, 0
    %p217 = por %p215, %p216
    %p218 = scmp.ne.s32.totalorder %s206, %s207
    %p219 = scmp.eq.s32.totalorder %s24, 1
    %p220 = por %p218, %p219
    %p222 = scmp.ne.s32.totalorder %s207, %s221
    %p223 = scmp.eq.s32.totalorder %s24, 0
    %p224 = por %p222, %p223
    %s226 = sadd.s32 %s225, 1
    %p229 = scmp.eq.s32.totalorder %s18, 1
    %p230 = scmp.ne.s32.totalorder %s225, %s227
    %p231 = scmp.eq.s32.totalorder %s18, 0
    %p232 = por %p230, %p231
    %p233 = scmp.ne.s32.totalorder %s225, %s227
    %p234 = scmp.eq.s32.totalorder %s23, 1
    %p235 = por %p233, %p234
    %p236 = scmp.ne.s32.totalorder %s227, %s228
    %p237 = scmp.eq.s32.totalorder %s23, 0
    %p238 = por %p236, %p237
    %p239 = scmp.ne.s32.totalorder %s227, %s228
    %p240 = scmp.eq.s32.totalorder %s24, 1
    %p241 = por %p239, %p240
    %p243 = scmp.ne.s32.totalorder %s228, %s242
    %p244 = scmp.eq.s32.totalorder %s24, 0
    %p245 = por %p243, %p244
    %s247 = sadd.s32 %s246, 1
    %p250 = scmp.eq.s32.totalorder %s18, 1
    %p251 = scmp.ne.s32.totalorder %s246, %s248
    %p252 = scmp.eq.s32.totalorder %s18, 0
    %p253 = por %p251, %p252
    %p254 = scmp.ne.s32.totalorder %s246, %s248
    %p255 = scmp.eq.s32.totalorder %s23, 1
    %p256 = por %p254, %p255
    %p257 = scmp.ne.s32.totalorder %s248, %s249
    %p258 = scmp.eq.s32.totalorder %s23, 0
    %p259 = por %p257, %p258
    %p260 = scmp.ne.s32.totalorder %s248, %s249
    %p261 = scmp.eq.s32.totalorder %s24, 1
    %p262 = por %p260, %p261
    %p264 = scmp.ne.s32.totalorder %s249, %s263
    %p265 = scmp.eq.s32.totalorder %s24, 0
    %p266 = por %p264, %p265
    %s268 = sadd.s32 %s267, 1
    %p271 = scmp.eq.s32.totalorder %s18, 1
    %p272 = scmp.ne.s32.totalorder %s267, %s269
    %p273 = scmp.eq.s32.totalorder %s18, 0
    %p274 = por %p272, %p273
    %p275 = scmp.ne.s32.totalorder %s267, %s269
    %p276 = scmp.eq.s32.totalorder %s23, 1
    %p277 = por %p275, %p276
    %p278 = scmp.ne.s32.totalorder %s269, %s270
    %p279 = scmp.eq.s32.totalorder %s23, 0
    %p280 = por %p278, %p279
    %p281 = scmp.ne.s32.totalorder %s269, %s270
    %p282 = scmp.eq.s32.totalorder %s24, 1
    %p283 = por %p281, %p282
    %p285 = scmp.ne.s32.totalorder %s270, %s284
    %p286 = scmp.eq.s32.totalorder %s24, 0
    %p287 = por %p285, %p286
    %s288 = ssub.s32 %s18, %s25
    %p289 = scmp.eq.s32.totalorder %s288, 0
    %s291 = sadd.s32 %s290, 1
    %s292 = scalar_select %p289, %s290, %s291
    %p295 = pneg %p289
    %p296 = scmp.eq.s32.totalorder %s18, 1
    %p297 = por %p295, %p296
    %p298 = scmp.ne.s32.totalorder %s290, %s293
    %p299 = scmp.eq.s32.totalorder %s18, 0
    %p300 = por %p298, %p299
    %p301 = scmp.ne.s32.totalorder %s290, %s293
    %p302 = scmp.eq.s32.totalorder %s23, 1
    %p303 = por %p301, %p302
    %p304 = scmp.ne.s32.totalorder %s293, %s294
    %p305 = scmp.eq.s32.totalorder %s23, 0
    %p306 = por %p304, %p305
    %p307 = scmp.ne.s32.totalorder %s293, %s294
    %p308 = scmp.eq.s32.totalorder %s24, 1
    %p309 = por %p307, %p308
    %p311 = scmp.ne.s32.totalorder %s294, %s310
    %p312 = scmp.eq.s32.totalorder %s24, 0
    %p313 = por %p311, %p312
    %p314 = scmp.le.s32.totalorder 1, %s18
    %p315 = scmp.lt.s32.totalorder %s18, 3
    %p316 = pnand %p314, %p315
    %p317 = pneg %p316
    // Predicated region
    $region9: #{tpu_custom_call.1} parent=5 // pred_check
      _
    $region10: #{tpu_custom_call.1} parent=5 // pred_check_branch
      %319 = sbr.rel (%p316) target = $region12
    $region11: #{tpu_custom_call.1} parent=5 // pred_region
      %s320 = ssub.s32 %s18, 1
      // Predicated region
      $region13: #{tpu_custom_call.1} parent=11 // pred_check
        %p321 = pneg %p91
      $region14: #{tpu_custom_call.1} parent=11 // pred_check_branch
        %323 = sbr.rel (%p321) target = $region16
      $region15: #{tpu_custom_call.1} parent=11 // pred_region
        _
      $region16: #{tpu_custom_call.1} parent=11 // pred_fallthru
        _
      // Predicated region
      $region17: #{tpu_custom_call.1} parent=11 // pred_check
        %p324 = pneg %p112
      $region18: #{tpu_custom_call.1} parent=11 // pred_check_branch
        %326 = sbr.rel (%p324) target = $region20
      $region19: #{tpu_custom_call.1} parent=11 // pred_region
        _
      $region20: #{tpu_custom_call.1} parent=11 // pred_fallthru
        _
      // Predicated region
      $region21: #{tpu_custom_call.1} parent=11 // pred_check
        %p327 = pneg %p133
      $region22: #{tpu_custom_call.1} parent=11 // pred_check_branch
        %329 = sbr.rel (%p327) target = $region24
      $region23: #{tpu_custom_call.1} parent=11 // pred_region
        _
      $region24: #{tpu_custom_call.1} parent=11 // pred_fallthru
        _
      // Predicated region
      $region25: #{tpu_custom_call.1} parent=11 // pred_check
        %p330 = pneg %p154
      $region26: #{tpu_custom_call.1} parent=11 // pred_check_branch
        %332 = sbr.rel (%p330) target = $region28
      $region27: #{tpu_custom_call.1} parent=11 // pred_region
        _
      $region28: #{tpu_custom_call.1} parent=11 // pred_fallthru
        _
      // Predicated region
      $region29: #{tpu_custom_call.1} parent=11 // pred_check
        %p333 = pneg %p175
      $region30: #{tpu_custom_call.1} parent=11 // pred_check_branch
        %335 = sbr.rel (%p333) target = $region32
      $region31: #{tpu_custom_call.1} parent=11 // pred_region
        _
      $region32: #{tpu_custom_call.1} parent=11 // pred_fallthru
        _
      // Predicated region
      $region33: #{tpu_custom_call.1} parent=11 // pred_check
        %p336 = pneg %p196
      $region34: #{tpu_custom_call.1} parent=11 // pred_check_branch
        %338 = sbr.rel (%p336) target = $region36
      $region35: #{tpu_custom_call.1} parent=11 // pred_region
        _
      $region36: #{tpu_custom_call.1} parent=11 // pred_fallthru
        _
      // Predicated region
      $region37: #{tpu_custom_call.1} parent=11 // pred_check
        %p339 = pneg %p217
      $region38: #{tpu_custom_call.1} parent=11 // pred_check_branch
        %341 = sbr.rel (%p339) target = $region40
      $region39: #{tpu_custom_call.1} parent=11 // pred_region
        _
      $region40: #{tpu_custom_call.1} parent=11 // pred_fallthru
        _
      // Predicated region
      $region41: #{tpu_custom_call.1} parent=11 // pred_check
        %p342 = pneg %p238
      $region42: #{tpu_custom_call.1} parent=11 // pred_check_branch
        %344 = sbr.rel (%p342) target = $region44
      $region43: #{tpu_custom_call.1} parent=11 // pred_region
        _
      $region44: #{tpu_custom_call.1} parent=11 // pred_fallthru
        _
      // Predicated region
      $region45: #{tpu_custom_call.1} parent=11 // pred_check
        %p345 = pneg %p259
      $region46: #{tpu_custom_call.1} parent=11 // pred_check_branch
        %347 = sbr.rel (%p345) target = $region48
      $region47: #{tpu_custom_call.1} parent=11 // pred_region
        _
      $region48: #{tpu_custom_call.1} parent=11 // pred_fallthru
        _
      // Predicated region
      $region49: #{tpu_custom_call.1} parent=11 // pred_check
        %p348 = pneg %p280
      $region50: #{tpu_custom_call.1} parent=11 // pred_check_branch
        %350 = sbr.rel (%p348) target = $region52
      $region51: #{tpu_custom_call.1} parent=11 // pred_region
        _
      $region52: #{tpu_custom_call.1} parent=11 // pred_fallthru
        _
    $region12: #{tpu_custom_call.1} parent=5 // pred_fallthru
      _
    %p351 = scmp.lt.s32.totalorder %s18, 2
    // Predicated region
    $region53: #{tpu_custom_call.1} parent=5 // pred_check
      %p352 = pneg %p351
    $region54: #{tpu_custom_call.1} parent=5 // pred_check_branch
      %354 = sbr.rel (%p352) target = $region56
    $region55: #{tpu_custom_call.1} parent=5 // pred_region
      // Predicated region
      $region57: #{tpu_custom_call.1} parent=55 // pred_check
        %p355 = pneg %p38
      $region58: #{tpu_custom_call.1} parent=55 // pred_check_branch
        %357 = sbr.rel (%p355) target = $region60
      $region59: #{tpu_custom_call.1} parent=55 // pred_region
        %p358 = scmp.lt.s32.totalorder %s18, 1
        %s359 = scalar_select %p358, %s18, 1
        %s360 = smul.addr %s359, 4
        %s361 = smul.addr %s360, 8
        %s362 = scalar_lea.vmem %s0, %s361
      $region60: #{tpu_custom_call.1} parent=55 // pred_fallthru
        _
      // Predicated region
      $region61: #{tpu_custom_call.1} parent=55 // pred_check
        %p363 = pneg %p64
      $region62: #{tpu_custom_call.1} parent=55 // pred_check_branch
        %365 = sbr.rel (%p363) target = $region64
      $region63: #{tpu_custom_call.1} parent=55 // pred_region
        %p366 = scmp.lt.s32.totalorder %s18, 1
        %s367 = scalar_select %p366, %s18, 1
        %s368 = smul.addr %s367, 2
        %s369 = smul.addr %s368, 8
        %s370 = scalar_lea.vmem %s1, %s369
      $region64: #{tpu_custom_call.1} parent=55 // pred_fallthru
        _
    $region56: #{tpu_custom_call.1} parent=5 // pred_fallthru
      _
    %p371 = scmp.le.s32.totalorder 1, %s18
    %p372 = scmp.lt.s32.totalorder %s18, 3
    %p373 = pnand %p371, %p372
    %p374 = pneg %p373
    // Predicated region
    $region65: #{tpu_custom_call.1} parent=5 // pred_check
      _
    $region66: #{tpu_custom_call.1} parent=5 // pred_check_branch
      %376 = sbr.rel (%p373) target = $region68
    $region67: #{tpu_custom_call.1} parent=5 // pred_region
      %s377 = ssub.s32 %s18, 1
      %p378 = scmp.lt.s32.totalorder %s23, 1
      %s379 = scalar_select %p378, %s23, 1
      %s380 = smul.addr %s379, 4
      %s381 = smul.addr %s380, 8
      %s382 = scalar_lea.vmem %s0, %s381
      %p383 = pneg %p44
      %p384 = pneg %p41
      %p385 = scmp.lt.s32.totalorder %s23, 1
      %s386 = scalar_select %p385, %s23, 1
      %s387 = smul.addr %s386, 2
      %s388 = smul.addr %s387, 8
      %s389 = scalar_lea.vmem %s1, %s388
      %p390 = pneg %p70
      %p391 = pneg %p67
      %p392 = pneg %p91
      %p393 = pneg %p88
      %p394 = pneg %p112
      %p395 = pneg %p109
      %p396 = pneg %p133
      %p397 = pneg %p130
      %p398 = pneg %p154
      %p399 = pneg %p151
      %p400 = pneg %p175
      %p401 = pneg %p172
      %p402 = pneg %p196
      %p403 = pneg %p193
      %p404 = pneg %p217
      %p405 = pneg %p214
      %p406 = pneg %p238
      %p407 = pneg %p235
      %p408 = pneg %p259
      %p409 = pneg %p256
      %p410 = pneg %p280
      %p411 = pneg %p277
      %p412 = pneg %p306
      %p413 = pneg %p303
      %p414 = scmp.lt.s32.totalorder %s23, 1
      %s415 = scalar_select %p414, %s23, 1
      %s416 = smul.addr %s415, 4
      %s417 = scalar_lea.vmem %s12, %s416
      %p418 = scmp.lt.s32.totalorder %s23, 1
      %s419 = scalar_select %p418, %s23, 1
      %s420 = smul.addr %s419, 4
      %s421 = smul.addr %s420, 8
      %s422 = scalar_lea.vmem %s0, %s421
      %p423 = scmp.lt.s32.totalorder %s23, 1
      %s424 = scalar_select %p423, %s23, 1
      %s425 = smul.addr %s424, 2
      %s426 = smul.addr %s425, 8
      %s427 = scalar_lea.vmem %s1, %s426
      %p428 = scmp.lt.s32.totalorder %s23, 1
      %s429 = scalar_select %p428, %s23, 1
      %s430 = smul.addr %s429, 4
      %s431 = scalar_lea.vmem %s12, %s430
      %v432 = vld [vmem:[%s422] sm:$0xff]
      %v433 = vld [vmem:[%s422 + $0x8] sm:$0xff]
      %v434 = vld [vmem:[%s422 + $0x10] sm:$0xff]
      %v435 = vld [vmem:[%s422 + $0x18] sm:$0xff]
      %v436 = vadd.f32 %v432, %v434
      %v437 = vrot.slane %v436, 4
      %v438 = vadd.f32 %v436, %v437
      %v439 = vrot.slane %v438, 2
      %v440 = vadd.f32 %v438, %v439
      %v441 = vrot.slane %v440, 1
      %v442 = vadd.f32 %v440, %v441
      %v443 = vadd.f32 %v433, %v435
      %v444 = vrot.slane %v443, 4
      %v445 = vadd.f32 %v443, %v444
      %v446 = vrot.slane %v445, 2
      %v447 = vadd.f32 %v445, %v446
      %v448 = vrot.slane %v447, 1
      %v449 = vadd.f32 %v447, %v448
      %v450 = vrcp.pop 16.0
      %v451 = vmul.f32 %v442, %v450
      %v452 = vmul.f32 %v449, %v450
      %v453 = vld [vmem:[%s8] sm:$0xff]
      %v454 = vld [vmem:[%s8 + $0x8] sm:$0xff]
      %v455 = vld [vmem:[%s8 + $0x10] sm:$0xff]
      %v456 = vld [vmem:[%s8 + $0x18] sm:$0xff]
      %v457 = vld [vmem:[%s8 + $0x20] sm:$0xff]
      %v458 = vld [vmem:[%s8 + $0x28] sm:$0xff]
      %v459 = vld [vmem:[%s8 + $0x30] sm:$0xff]
      %v460 = vld [vmem:[%s8 + $0x38] sm:$0xff]
      %v461 = vld [vmem:[%s8 + $0x40] sm:$0xff]
      %v462 = vld [vmem:[%s8 + $0x48] sm:$0xff]
      %v463 = vld [vmem:[%s8 + $0x50] sm:$0xff]
      %v464 = vld [vmem:[%s8 + $0x58] sm:$0xff]
      %v465 = vld [vmem:[%s8 + $0x60] sm:$0xff]
      %v466 = vld [vmem:[%s8 + $0x68] sm:$0xff]
      %v467 = vld [vmem:[%s8 + $0x70] sm:$0xff]
      %v468 = vld [vmem:[%s8 + $0x78] sm:$0xff]
      %v469 = vld [vmem:[%s8 + $0x80] sm:$0xff]
      %v470 = vld [vmem:[%s8 + $0x88] sm:$0xff]
      %v471 = vld [vmem:[%s8 + $0x90] sm:$0xff]
      %v472 = vld [vmem:[%s8 + $0x98] sm:$0xff]
      %v473 = vld [vmem:[%s8 + $0xa0] sm:$0xff]
      %v474 = vld [vmem:[%s8 + $0xa8] sm:$0xff]
      %v475 = vld [vmem:[%s8 + $0xb0] sm:$0xff]
      %v476 = vld [vmem:[%s8 + $0xb8] sm:$0xff]
      %v477 = vld [vmem:[%s8 + $0xc0] sm:$0xff]
      %v478 = vld [vmem:[%s8 + $0xc8] sm:$0xff]
      %v479 = vld [vmem:[%s8 + $0xd0] sm:$0xff]
      %v480 = vld [vmem:[%s8 + $0xd8] sm:$0xff]
      %v481 = vld [vmem:[%s8 + $0xe0] sm:$0xff]
      %v482 = vld [vmem:[%s8 + $0xe8] sm:$0xff]
      %v483 = vld [vmem:[%s8 + $0xf0] sm:$0xff]
      %v484 = vld [vmem:[%s8 + $0xf8] sm:$0xff]
      %v485 = vld [vmem:[%s9] sm:$0x1]
      %486 = vmatprep.subr.mxu0 0.0
      %487 = vmatpush1.msra.mxu0 %v468
      %488 = vmatprep.subr.mxu0 0.0
      %489 = vmatpush1.msra.mxu0 %v467
      %490 = vmatprep.subr.mxu0 0.0
      %491 = vmatpush1.msra.mxu0 %v466
      %492 = vmatprep.subr.mxu0 0.0
      %493 = vmatpush1.msra.mxu0 %v465
      %494 = vmatprep.subr.mxu0 0.0
      %495 = vmatpush1.msra.mxu0 %v464
      %496 = vmatprep.subr.mxu0 0.0
      %497 = vmatpush1.msra.mxu0 %v463
      %498 = vmatprep.subr.mxu0 0.0
      %499 = vmatpush1.msra.mxu0 %v462
      %500 = vmatprep.subr.mxu0 0.0
      %501 = vmatpush1.msra.mxu0 %v461
      %502 = vmatprep.subr.mxu0 0.0
      %503 = vmatpush1.msra.mxu0 %v460
      %504 = vmatprep.subr.mxu0 0.0
      %505 = vmatpush1.msra.mxu0 %v459
      %506 = vmatprep.subr.mxu0 0.0
      %507 = vmatpush1.msra.mxu0 %v458
      %508 = vmatprep.subr.mxu0 0.0
      %509 = vmatpush1.msra.mxu0 %v457
      %510 = vmatprep.subr.mxu0 0.0
      %511 = vmatpush1.msra.mxu0 %v456
      %512 = vmatprep.subr.mxu0 0.0
      %513 = vmatpush1.msra.mxu0 %v455
      %514 = vmatprep.subr.mxu0 0.0
      %515 = vmatpush1.msra.mxu0 %v454
      %516 = vmatprep.subr.mxu0 0.0
      %517 = vmatpush1.msra.mxu0 %v453
      %518 = vmatprep.subr.mxu0 0.0
      %519 = vmatpush2.msra.mxu0 %v484
      %520 = vmatprep.subr.mxu0 0.0
      %521 = vmatpush2.msra.mxu0 %v483
      %522 = vmatprep.subr.mxu0 0.0
      %523 = vmatpush2.msra.mxu0 %v482
      %524 = vmatprep.subr.mxu0 0.0
      %525 = vmatpush2.msra.mxu0 %v481
      %526 = vmatprep.subr.mxu0 0.0
      %527 = vmatpush2.msra.mxu0 %v480
      %528 = vmatprep.subr.mxu0 0.0
      %529 = vmatpush2.msra.mxu0 %v479
      %530 = vmatprep.subr.mxu0 0.0
      %531 = vmatpush2.msra.mxu0 %v478
      %532 = vmatprep.subr.mxu0 0.0
      %533 = vmatpush2.msra.mxu0 %v477
      %534 = vmatprep.subr.mxu0 0.0
      %535 = vmatpush2.msra.mxu0 %v476
      %536 = vmatprep.subr.mxu0 0.0
      %537 = vmatpush2.msra.mxu0 %v475
      %538 = vmatprep.subr.mxu0 0.0
      %539 = vmatpush2.msra.mxu0 %v474
      %540 = vmatprep.subr.mxu0 0.0
      %541 = vmatpush2.msra.mxu0 %v473
      %542 = vmatprep.subr.mxu0 0.0
      %543 = vmatpush2.msra.mxu0 %v472
      %544 = vmatprep.subr.mxu0 0.0
      %545 = vmatpush2.msra.mxu0 %v471
      %546 = vmatprep.subr.mxu0 0.0
      %547 = vmatpush2.msra.mxu0 %v470
      %548 = vmatprep.subr.mxu0 0.0
      %549 = vmatpush2.msra.mxu0 %v469
      %550 = vmatprep.mubr.f32.mxu0 %v452
      %551 = vmatmul.mubr.f32.gmra.mxu0 %v451
      %v552 = vpop.f32.mrf.mxu0
      %v553 = vadd.f32 %v485, %v552
      %v554 = vpop.f32.mrf.mxu0
      %555 = vdwg.mxu0
      %v556 = vld [vmem:[%s10] sm:$0xff]
      %v557 = vld [vmem:[%s10 + $0x8] sm:$0xff]
      %v558 = vld [vmem:[%s10 + $0x10] sm:$0xff]
      %v559 = vld [vmem:[%s10 + $0x18] sm:$0xff]
      %v560 = vld [vmem:[%s10 + $0x20] sm:$0xff]
      %v561 = vld [vmem:[%s10 + $0x28] sm:$0xff]
      %v562 = vld [vmem:[%s10 + $0x30] sm:$0xff]
      %v563 = vld [vmem:[%s10 + $0x38] sm:$0xff]
      %v564 = vld [vmem:[%s10 + $0x40] sm:$0xff]
      %v565 = vld [vmem:[%s10 + $0x48] sm:$0xff]
      %v566 = vld [vmem:[%s10 + $0x50] sm:$0xff]
      %v567 = vld [vmem:[%s10 + $0x58] sm:$0xff]
      %v568 = vld [vmem:[%s10 + $0x60] sm:$0xff]
      %v569 = vld [vmem:[%s10 + $0x68] sm:$0xff]
      %v570 = vld [vmem:[%s10 + $0x70] sm:$0xff]
      %v571 = vld [vmem:[%s10 + $0x78] sm:$0xff]
      %v572 = vld [vmem:[%s10 + $0x80] sm:$0xff]
      %v573 = vld [vmem:[%s10 + $0x88] sm:$0xff]
      %v574 = vld [vmem:[%s10 + $0x90] sm:$0xff]
      %v575 = vld [vmem:[%s10 + $0x98] sm:$0xff]
      %v576 = vld [vmem:[%s10 + $0xa0] sm:$0xff]
      %v577 = vld [vmem:[%s10 + $0xa8] sm:$0xff]
      %v578 = vld [vmem:[%s10 + $0xb0] sm:$0xff]
      %v579 = vld [vmem:[%s10 + $0xb8] sm:$0xff]
      %v580 = vld [vmem:[%s10 + $0xc0] sm:$0xff]
      %v581 = vld [vmem:[%s10 + $0xc8] sm:$0xff]
      %v582 = vld [vmem:[%s10 + $0xd0] sm:$0xff]
      %v583 = vld [vmem:[%s10 + $0xd8] sm:$0xff]
      %v584 = vld [vmem:[%s10 + $0xe0] sm:$0xff]
      %v585 = vld [vmem:[%s10 + $0xe8] sm:$0xff]
      %v586 = vld [vmem:[%s10 + $0xf0] sm:$0xff]
      %v587 = vld [vmem:[%s10 + $0xf8] sm:$0xff]
      %v588 = vld [vmem:[%s11] sm:$0x1]
      %589 = vmatprep.subr.mxu0 0.0
      %590 = vmatpush1.msra.mxu0 %v571
      %591 = vmatprep.subr.mxu0 0.0
      %592 = vmatpush1.msra.mxu0 %v570
      %593 = vmatprep.subr.mxu0 0.0
      %594 = vmatpush1.msra.mxu0 %v569
      %595 = vmatprep.subr.mxu0 0.0
      %596 = vmatpush1.msra.mxu0 %v568
      %597 = vmatprep.subr.mxu0 0.0
      %598 = vmatpush1.msra.mxu0 %v567
      %599 = vmatprep.subr.mxu0 0.0
      %600 = vmatpush1.msra.mxu0 %v566
      %601 = vmatprep.subr.mxu0 0.0
      %602 = vmatpush1.msra.mxu0 %v565
      %603 = vmatprep.subr.mxu0 0.0
      %604 = vmatpush1.msra.mxu0 %v564
      %605 = vmatprep.subr.mxu0 0.0
      %606 = vmatpush1.msra.mxu0 %v563
      %607 = vmatprep.subr.mxu0 0.0
      %608 = vmatpush1.msra.mxu0 %v562
      %609 = vmatprep.subr.mxu0 0.0
      %610 = vmatpush1.msra.mxu0 %v561
      %611 = vmatprep.subr.mxu0 0.0
      %612 = vmatpush1.msra.mxu0 %v560
      %613 = vmatprep.subr.mxu0 0.0
      %614 = vmatpush1.msra.mxu0 %v559
      %615 = vmatprep.subr.mxu0 0.0
      %616 = vmatpush1.msra.mxu0 %v558
      %617 = vmatprep.subr.mxu0 0.0
      %618 = vmatpush1.msra.mxu0 %v557
      %619 = vmatprep.subr.mxu0 0.0
      %620 = vmatpush1.msra.mxu0 %v556
      %621 = vmatprep.subr.mxu0 0.0
      %622 = vmatpush2.msra.mxu0 %v587
      %623 = vmatprep.subr.mxu0 0.0
      %624 = vmatpush2.msra.mxu0 %v586
      %625 = vmatprep.subr.mxu0 0.0
      %626 = vmatpush2.msra.mxu0 %v585
      %627 = vmatprep.subr.mxu0 0.0
      %628 = vmatpush2.msra.mxu0 %v584
      %629 = vmatprep.subr.mxu0 0.0
      %630 = vmatpush2.msra.mxu0 %v583
      %631 = vmatprep.subr.mxu0 0.0
      %632 = vmatpush2.msra.mxu0 %v582
      %633 = vmatprep.subr.mxu0 0.0
      %634 = vmatpush2.msra.mxu0 %v581
      %635 = vmatprep.subr.mxu0 0.0
      %636 = vmatpush2.msra.mxu0 %v580
      %637 = vmatprep.subr.mxu0 0.0
      %638 = vmatpush2.msra.mxu0 %v579
      %639 = vmatprep.subr.mxu0 0.0
      %640 = vmatpush2.msra.mxu0 %v578
      %641 = vmatprep.subr.mxu0 0.0
      %642 = vmatpush2.msra.mxu0 %v577
      %643 = vmatprep.subr.mxu0 0.0
      %644 = vmatpush2.msra.mxu0 %v576
      %645 = vmatprep.subr.mxu0 0.0
      %646 = vmatpush2.msra.mxu0 %v575
      %647 = vmatprep.subr.mxu0 0.0
      %648 = vmatpush2.msra.mxu0 %v574
      %649 = vmatprep.subr.mxu0 0.0
      %650 = vmatpush2.msra.mxu0 %v573
      %651 = vmatprep.subr.mxu0 0.0
      %652 = vmatpush2.msra.mxu0 %v572
      %653 = vmatprep.mubr.f32.mxu0 %v452
      %654 = vmatmul.mubr.f32.gmra.mxu0 %v451
      %v655 = vpop.f32.mrf.mxu0
      %v656 = vadd.f32 %v588, %v655
      %v657 = vpop.f32.mrf.mxu0
      %658 = vdwg.mxu0
      %v659 = vld [vmem:[%s427] sm:$0xff]
      %v660 = vld [vmem:[%s427 + $0x8] sm:$0xff]
      %v661 = vld [vmem:[%s2] sm:$0xff]
      %v662 = vld [vmem:[%s2 + $0x8] sm:$0xff]
      %vm663 = vcmask 130048
      %v664 = vsel %vm663, %v661, 0.0
      %665 = vadd.xlane.f32.xlu0 %v664
      %v666 = vpop.xlane.xlu0 %665
      %v667 = vsel %vm663, %v662, 0.0
      %668 = vadd.xlane.f32.xlu0 %v667
      %v669 = vpop.xlane.xlu0 %668
      %v670 = vrsqrt.pop %v666
      %v671 = vrsqrt.pop %v669
      %672 = vxpose.xlu0.b32.start [1/16] %v661, 128
      %673 = vxpose.xlu0.b32.cont [2/16] %v662, 128
      %674 = vxpose.xlu0.b32.cont [3/16] 0.0, 128
      %675 = vxpose.xlu0.b32.cont [4/16] 0.0, 128
      %676 = vxpose.xlu0.b32.cont [5/16] 0.0, 128
      %677 = vxpose.xlu0.b32.cont [6/16] 0.0, 128
      %678 = vxpose.xlu0.b32.cont [7/16] 0.0, 128
      %679 = vxpose.xlu0.b32.cont [8/16] 0.0, 128
      %680 = vxpose.xlu0.b32.cont [9/16] 0.0, 128
      %681 = vxpose.xlu0.b32.cont [10/16] 0.0, 128
      %682 = vxpose.xlu0.b32.cont [11/16] 0.0, 128
      %683 = vxpose.xlu0.b32.cont [12/16] 0.0, 128
      %684 = vxpose.xlu0.b32.cont [13/16] 0.0, 128
      %685 = vxpose.xlu0.b32.cont [14/16] 0.0, 128
      %686 = vxpose.xlu0.b32.cont [15/16] 0.0, 128
      %687 = vxpose.xlu0.b32.end [16/16] 0.0, 128
      %v688 = vpop.trf.xlu0
      %v689 = vpop.trf.xlu0
      %v690 = vpop.trf.xlu0
      %v691 = vpop.trf.xlu0
      %v692 = vpop.trf.xlu0
      %v693 = vpop.trf.xlu0
      %v694 = vpop.trf.xlu0
      %v695 = vpop.trf.xlu0
      %v696 = vpop.trf.xlu0
      %v697 = vpop.trf.xlu0
      %v698 = vpop.trf.xlu0
      %v699 = vpop.trf.xlu0
      %v700 = vpop.trf.xlu0
      %v701 = vpop.trf.xlu0
      %v702 = vpop.trf.xlu0
      %v703 = vpop.trf.xlu0
      %v704 = vmul.f32 %v670, %v659
      %v705 = vmul.f32 %v671, %v660
      %v707 = vsel %vm663, %v688, 0
      %v710 = vsel %vm663, %v689, 0
      %712 = vmatprep.subr.mxu0 0.0
      %713 = vmatpush1.msra.mxu0 0.0
      %714 = vmatprep.subr.mxu0 0.0
      %715 = vmatpush1.msra.mxu0 0.0
      %716 = vmatprep.subr.mxu0 0.0
      %717 = vmatpush1.msra.mxu0 0.0
      %718 = vmatprep.subr.mxu0 0.0
      %719 = vmatpush1.msra.mxu0 0.0
      %720 = vmatprep.subr.mxu0 0.0
      %721 = vmatpush1.msra.mxu0 0.0
      %722 = vmatprep.subr.mxu0 0.0
      %723 = vmatpush1.msra.mxu0 0.0
      %724 = vmatprep.subr.mxu0 0.0
      %725 = vmatpush1.msra.mxu0 0.0
      %726 = vmatprep.subr.mxu0 0.0
      %727 = vmatpush1.msra.mxu0 0.0
      %728 = vmatprep.subr.mxu0 0.0
      %729 = vmatpush1.msra.mxu0 0.0
      %730 = vmatprep.subr.mxu0 0.0
      %731 = vmatpush1.msra.mxu0 0.0
      %732 = vmatprep.subr.mxu0 0.0
      %733 = vmatpush1.msra.mxu0 0.0
      %734 = vmatprep.subr.mxu0 0.0
      %735 = vmatpush1.msra.mxu0 0.0
      %736 = vmatprep.subr.mxu0 0.0
      %737 = vmatpush1.msra.mxu0 0.0
      %738 = vmatprep.subr.mxu0 0.0
      %739 = vmatpush1.msra.mxu0 0.0
      %740 = vmatprep.subr.mxu0 0.0
      %741 = vmatpush1.msra.mxu0 %v705
      %742 = vmatprep.subr.mxu0 0.0
      %743 = vmatpush1.msra.mxu0 %v704
      %744 = vmatprep.subr.mxu0 0.0
      %745 = vmatpush2.msra.mxu0 0.0
      %746 = vmatprep.subr.mxu0 0.0
      %747 = vmatpush2.msra.mxu0 0.0
      %748 = vmatprep.subr.mxu0 0.0
      %749 = vmatpush2.msra.mxu0 0.0
      %750 = vmatprep.subr.mxu0 0.0
      %751 = vmatpush2.msra.mxu0 0.0
      %752 = vmatprep.subr.mxu0 0.0
      %753 = vmatpush2.msra.mxu0 0.0
      %754 = vmatprep.subr.mxu0 0.0
      %755 = vmatpush2.msra.mxu0 0.0
      %756 = vmatprep.subr.mxu0 0.0
      %757 = vmatpush2.msra.mxu0 0.0
      %758 = vmatprep.subr.mxu0 0.0
      %759 = vmatpush2.msra.mxu0 0.0
      %760 = vmatprep.subr.mxu0 0.0
      %761 = vmatpush2.msra.mxu0 0.0
      %762 = vmatprep.subr.mxu0 0.0
      %763 = vmatpush2.msra.mxu0 0.0
      %764 = vmatprep.subr.mxu0 0.0
      %765 = vmatpush2.msra.mxu0 0.0
      %766 = vmatprep.subr.mxu0 0.0
      %767 = vmatpush2.msra.mxu0 0.0
      %768 = vmatprep.subr.mxu0 0.0
      %769 = vmatpush2.msra.mxu0 0.0
      %770 = vmatprep.subr.mxu0 0.0
      %771 = vmatpush2.msra.mxu0 0.0
      %772 = vmatprep.subr.mxu0 0.0
      %773 = vmatpush2.msra.mxu0 0.0
      %774 = vmatprep.subr.mxu0 0.0
      %775 = vmatpush2.msra.mxu0 0.0
      %776 = vmatprep.mubr.f32.mxu0 0.0
      %777 = vmatmul.mubr.f32.gmra.mxu0 %v707
      %v778 = vpop.f32.mrf.mxu0
      %v779 = vadd.f32 0.0, %v778
      %v780 = vpop.f32.mrf.mxu0
      %781 = vmatprep.mubr.f32.mxu0 0.0
      %782 = vmatmul.mubr.f32.gmra.mxu0 %v710
      %v783 = vpop.f32.mrf.mxu0
      %v784 = vadd.f32 0.0, %v783
      %v785 = vpop.f32.mrf.mxu0
      %786 = vdwg.mxu0
      %v787 = vmul.f32 %v670, %v779
      %v788 = vmul.f32 %v671, %v784
      %v789 = vmul.f32 %v787, 0.2
      %v790 = vmul.f32 %v788, 0.2
      %v791 = vmax.f32 %v787, %v789
      %v792 = vmax.f32 %v788, %v790
      %v793 = vld [vmem:[%s3] sm:$0xff]
      %v794 = vld [vmem:[%s3 + $0x8] sm:$0xff]
      %v795 = vld [vmem:[%s3 + $0x10] sm:$0xff]
      %v796 = vld [vmem:[%s3 + $0x18] sm:$0xff]
      %v797 = vld [vmem:[%s3 + $0x20] sm:$0xff]
      %v798 = vld [vmem:[%s3 + $0x28] sm:$0xff]
      %v799 = vld [vmem:[%s3 + $0x30] sm:$0xff]
      %v800 = vld [vmem:[%s3 + $0x38] sm:$0xff]
      %vm801 = vcmask 523264
      %v803 = vsel %vm801, %v791, 0
      %v806 = vsel %vm801, %v792, 0
      %808 = vmatprep.subr.mxu0 0.0
      %809 = vmatpush1.msra.mxu0 0.0
      %810 = vmatprep.subr.mxu0 0.0
      %811 = vmatpush1.msra.mxu0 0.0
      %812 = vmatprep.subr.mxu0 0.0
      %813 = vmatpush1.msra.mxu0 0.0
      %814 = vmatprep.subr.mxu0 0.0
      %815 = vmatpush1.msra.mxu0 0.0
      %816 = vmatprep.subr.mxu0 0.0
      %817 = vmatpush1.msra.mxu0 0.0
      %818 = vmatprep.subr.mxu0 0.0
      %819 = vmatpush1.msra.mxu0 0.0
      %820 = vmatprep.subr.mxu0 0.0
      %821 = vmatpush1.msra.mxu0 0.0
      %822 = vmatprep.subr.mxu0 0.0
      %823 = vmatpush1.msra.mxu0 0.0
      %824 = vmatprep.subr.mxu0 0.0
      %825 = vmatpush1.msra.mxu0 %v800
      %826 = vmatprep.subr.mxu0 0.0
      %827 = vmatpush1.msra.mxu0 %v799
      %828 = vmatprep.subr.mxu0 0.0
      %829 = vmatpush1.msra.mxu0 %v798
      %830 = vmatprep.subr.mxu0 0.0
      %831 = vmatpush1.msra.mxu0 %v797
      %832 = vmatprep.subr.mxu0 0.0
      %833 = vmatpush1.msra.mxu0 %v796
      %834 = vmatprep.subr.mxu0 0.0
      %835 = vmatpush1.msra.mxu0 %v795
      %836 = vmatprep.subr.mxu0 0.0
      %837 = vmatpush1.msra.mxu0 %v794
      %838 = vmatprep.subr.mxu0 0.0
      %839 = vmatpush1.msra.mxu0 %v793
      %840 = vmatprep.subr.mxu0 0.0
      %841 = vmatpush2.msra.mxu0 0.0
      %842 = vmatprep.subr.mxu0 0.0
      %843 = vmatpush2.msra.mxu0 0.0
      %844 = vmatprep.subr.mxu0 0.0
      %845 = vmatpush2.msra.mxu0 0.0
      %846 = vmatprep.subr.mxu0 0.0
      %847 = vmatpush2.msra.mxu0 0.0
      %848 = vmatprep.subr.mxu0 0.0
      %849 = vmatpush2.msra.mxu0 0.0
      %850 = vmatprep.subr.mxu0 0.0
      %851 = vmatpush2.msra.mxu0 0.0
      %852 = vmatprep.subr.mxu0 0.0
      %853 = vmatpush2.msra.mxu0 0.0
      %854 = vmatprep.subr.mxu0 0.0
      %855 = vmatpush2.msra.mxu0 0.0
      %856 = vmatprep.subr.mxu0 0.0
      %857 = vmatpush2.msra.mxu0 0.0
      %858 = vmatprep.subr.mxu0 0.0
      %859 = vmatpush2.msra.mxu0 0.0
      %860 = vmatprep.subr.mxu0 0.0
      %861 = vmatpush2.msra.mxu0 0.0
      %862 = vmatprep.subr.mxu0 0.0
      %863 = vmatpush2.msra.mxu0 0.0
      %864 = vmatprep.subr.mxu0 0.0
      %865 = vmatpush2.msra.mxu0 0.0
      %866 = vmatprep.subr.mxu0 0.0
      %867 = vmatpush2.msra.mxu0 0.0
      %868 = vmatprep.subr.mxu0 0.0
      %869 = vmatpush2.msra.mxu0 0.0
      %870 = vmatprep.subr.mxu0 0.0
      %871 = vmatpush2.msra.mxu0 0.0
      %872 = vmatprep.mubr.f32.mxu0 0.0
      %873 = vmatmul.mubr.f32.gmra.mxu0 %v803
      %v874 = vpop.f32.mrf.mxu0
      %v875 = vadd.f32 0.0, %v874
      %v876 = vpop.f32.mrf.mxu0
      %877 = vmatprep.mubr.f32.mxu0 0.0
      %878 = vmatmul.mubr.f32.gmra.mxu0 %v806
      %v879 = vpop.f32.mrf.mxu0
      %v880 = vadd.f32 0.0, %v879
      %v881 = vpop.f32.mrf.mxu0
      %882 = vdwg.mxu0
      %v883 = vadd.f32 %v659, %v875
      %v884 = vadd.f32 %v660, %v880
      %v885 = vld [vmem:[%s4] sm:$0xff]
      %v886 = vld [vmem:[%s4 + $0x8] sm:$0xff]
      %v887 = vlaneseq
      %v888 = vshrl.u32 %v887, 7
      %v889 = vsub.s32 0, %v888
      %v890 = vrot.slane %v656, %v889
      %v891 = vmul.f32 %v885, %v890
      %v892 = vmul.f32 %v886, %v890
      %v893 = vsel %vm801, %v891, 0.0
      %894 = vadd.xlane.f32.xlu0 %v893
      %v895 = vpop.xlane.xlu0 %894
      %v896 = vsel %vm801, %v892, 0.0
      %897 = vadd.xlane.f32.xlu0 %v896
      %v898 = vpop.xlane.xlu0 %897
      %v899 = vld [vmem:[%s5] sm:$0xff]
      %v900 = vld [vmem:[%s5 + $0x8] sm:$0xff]
      %v902 = vsel %vm801, %v899, 0
      %v905 = vsel %vm801, %v900, 0
      %v908 = vsel %vm801, %v883, 0
      %v911 = vsel %vm801, %v884, 0
      %913 = vmatprep.subr.mxu0 0.0
      %914 = vmatpush1.xpose.msra.mxu0 0.0
      %915 = vmatprep.subr.mxu0 0.0
      %916 = vmatpush1.xpose.msra.mxu0 0.0
      %917 = vmatprep.subr.mxu0 0.0
      %918 = vmatpush1.xpose.msra.mxu0 0.0
      %919 = vmatprep.subr.mxu0 0.0
      %920 = vmatpush1.xpose.msra.mxu0 0.0
      %921 = vmatprep.subr.mxu0 0.0
      %922 = vmatpush1.xpose.msra.mxu0 0.0
      %923 = vmatprep.subr.mxu0 0.0
      %924 = vmatpush1.xpose.msra.mxu0 0.0
      %925 = vmatprep.subr.mxu0 0.0
      %926 = vmatpush1.xpose.msra.mxu0 0.0
      %927 = vmatprep.subr.mxu0 0.0
      %928 = vmatpush1.xpose.msra.mxu0 0.0
      %929 = vmatprep.subr.mxu0 0.0
      %930 = vmatpush1.xpose.msra.mxu0 0.0
      %931 = vmatprep.subr.mxu0 0.0
      %932 = vmatpush1.xpose.msra.mxu0 0.0
      %933 = vmatprep.subr.mxu0 0.0
      %934 = vmatpush1.xpose.msra.mxu0 0.0
      %935 = vmatprep.subr.mxu0 0.0
      %936 = vmatpush1.xpose.msra.mxu0 0.0
      %937 = vmatprep.subr.mxu0 0.0
      %938 = vmatpush1.xpose.msra.mxu0 0.0
      %939 = vmatprep.subr.mxu0 0.0
      %940 = vmatpush1.xpose.msra.mxu0 0.0
      %941 = vmatprep.subr.mxu0 0.0
      %942 = vmatpush1.xpose.msra.mxu0 %v911
      %943 = vmatprep.subr.mxu0 0.0
      %944 = vmatpush1.xpose.msra.mxu0 %v908
      %945 = vmatprep.subr.mxu0 0.0
      %946 = vmatpush2.xpose.msra.mxu0 0.0
      %947 = vmatprep.subr.mxu0 0.0
      %948 = vmatpush2.xpose.msra.mxu0 0.0
      %949 = vmatprep.subr.mxu0 0.0
      %950 = vmatpush2.xpose.msra.mxu0 0.0
      %951 = vmatprep.subr.mxu0 0.0
      %952 = vmatpush2.xpose.msra.mxu0 0.0
      %953 = vmatprep.subr.mxu0 0.0
      %954 = vmatpush2.xpose.msra.mxu0 0.0
      %955 = vmatprep.subr.mxu0 0.0
      %956 = vmatpush2.xpose.msra.mxu0 0.0
      %957 = vmatprep.subr.mxu0 0.0
      %958 = vmatpush2.xpose.msra.mxu0 0.0
      %959 = vmatprep.subr.mxu0 0.0
      %960 = vmatpush2.xpose.msra.mxu0 0.0
      %961 = vmatprep.subr.mxu0 0.0
      %962 = vmatpush2.xpose.msra.mxu0 0.0
      %963 = vmatprep.subr.mxu0 0.0
      %964 = vmatpush2.xpose.msra.mxu0 0.0
      %965 = vmatprep.subr.mxu0 0.0
      %966 = vmatpush2.xpose.msra.mxu0 0.0
      %967 = vmatprep.subr.mxu0 0.0
      %968 = vmatpush2.xpose.msra.mxu0 0.0
      %969 = vmatprep.subr.mxu0 0.0
      %970 = vmatpush2.xpose.msra.mxu0 0.0
      %971 = vmatprep.subr.mxu0 0.0
      %972 = vmatpush2.xpose.msra.mxu0 0.0
      %973 = vmatprep.subr.mxu0 0.0
      %974 = vmatpush2.xpose.msra.mxu0 0.0
      %975 = vmatprep.subr.mxu0 0.0
      %976 = vmatpush2.xpose.msra.mxu0 0.0
      %977 = vmatprep.mubr.f32.mxu0 0.0
      %978 = vmatmul.mubr.f32.gmra.mxu0 %v902
      %v979 = vpop.f32.mrf.mxu0
      %v980 = vadd.f32 0.0, %v979
      %v981 = vpop.f32.mrf.mxu0
      %982 = vmatprep.mubr.f32.mxu0 0.0
      %983 = vmatmul.mubr.f32.gmra.mxu0 %v905
      %v984 = vpop.f32.mrf.mxu0
      %v985 = vadd.f32 0.0, %v984
      %v986 = vpop.f32.mrf.mxu0
      %987 = vdwg.mxu0
      %v988 = vadd.f32 %v895, %v980
      %v989 = vadd.f32 %v898, %v985
      %v990 = vld [vmem:[%s6] sm:$0xff]
      %v991 = vld [vmem:[%s6 + $0x8] sm:$0xff]
      %993 = vset.pattern.permute.xlu0 0
      %994 = vperm.xlu0 %993, %v990
      %v995 = vpop.permute.xlu0 %994
      %998 = vset.pattern.permute.xlu0 0
      %999 = vperm.xlu0 %998, %v991
      %v1000 = vpop.permute.xlu0 %999
      %v1002 = vadd.f32 %v988, %v995
      %v1003 = vadd.f32 %v989, %v1000
      %v1004 = vxor.u32 %v1002, 2147483648
      %v1005 = vxor.u32 %v1003, 2147483648
      %v1006 = vmul.f32 %v1004, 1.442695
      %v1007 = vpow.pop %v1006
      %v1008 = vmul.f32 %v1005, 1.442695
      %v1009 = vpow.pop %v1008
      %v1010 = vadd.f32 %v1007, 1.0
      %v1011 = vadd.f32 %v1009, 1.0
      %v1012 = vrcp.pop %v1010
      %v1013 = vmul.f32 1.0, %v1012
      %v1014 = vrcp.pop %v1011
      %v1015 = vmul.f32 1.0, %v1014
      %v1016 = vsel %vm663, %v1013, 0.0
      %1017 = vadd.xlane.f32.xlu0 %v1016
      %v1018 = vpop.xlane.xlu0 %1017
      %v1019 = vsel %vm663, %v1015, 0.0
      %1020 = vadd.xlane.f32.xlu0 %v1019
      %v1021 = vpop.xlane.xlu0 %1020
      %v1022 = vrsqrt.pop %v1018
      %v1023 = vrsqrt.pop %v1021
      %1024 = vxpose.xlu0.b32.start [1/16] %v1013, 128
      %1025 = vxpose.xlu0.b32.cont [2/16] %v1015, 128
      %1026 = vxpose.xlu0.b32.cont [3/16] 0.0, 128
      %1027 = vxpose.xlu0.b32.cont [4/16] 0.0, 128
      %1028 = vxpose.xlu0.b32.cont [5/16] 0.0, 128
      %1029 = vxpose.xlu0.b32.cont [6/16] 0.0, 128
      %1030 = vxpose.xlu0.b32.cont [7/16] 0.0, 128
      %1031 = vxpose.xlu0.b32.cont [8/16] 0.0, 128
      %1032 = vxpose.xlu0.b32.cont [9/16] 0.0, 128
      %1033 = vxpose.xlu0.b32.cont [10/16] 0.0, 128
      %1034 = vxpose.xlu0.b32.cont [11/16] 0.0, 128
      %1035 = vxpose.xlu0.b32.cont [12/16] 0.0, 128
      %1036 = vxpose.xlu0.b32.cont [13/16] 0.0, 128
      %1037 = vxpose.xlu0.b32.cont [14/16] 0.0, 128
      %1038 = vxpose.xlu0.b32.cont [15/16] 0.0, 128
      %1039 = vxpose.xlu0.b32.end [16/16] 0.0, 128
      %v1040 = vpop.trf.xlu0
      %v1041 = vpop.trf.xlu0
      %v1042 = vpop.trf.xlu0
      %v1043 = vpop.trf.xlu0
      %v1044 = vpop.trf.xlu0
      %v1045 = vpop.trf.xlu0
      %v1046 = vpop.trf.xlu0
      %v1047 = vpop.trf.xlu0
      %v1048 = vpop.trf.xlu0
      %v1049 = vpop.trf.xlu0
      %v1050 = vpop.trf.xlu0
      %v1051 = vpop.trf.xlu0
      %v1052 = vpop.trf.xlu0
      %v1053 = vpop.trf.xlu0
      %v1054 = vpop.trf.xlu0
      %v1055 = vpop.trf.xlu0
      %v1056 = vmul.f32 %v1022, %v883
      %v1057 = vmul.f32 %v1023, %v884
      %v1059 = vsel %vm663, %v1040, 0
      %v1062 = vsel %vm663, %v1041, 0
      %1064 = vmatprep.subr.mxu0 0.0
      %1065 = vmatpush1.msra.mxu0 0.0
      %1066 = vmatprep.subr.mxu0 0.0
      %1067 = vmatpush1.msra.mxu0 0.0
      %1068 = vmatprep.subr.mxu0 0.0
      %1069 = vmatpush1.msra.mxu0 0.0
      %1070 = vmatprep.subr.mxu0 0.0
      %1071 = vmatpush1.msra.mxu0 0.0
      %1072 = vmatprep.subr.mxu0 0.0
      %1073 = vmatpush1.msra.mxu0 0.0
      %1074 = vmatprep.subr.mxu0 0.0
      %1075 = vmatpush1.msra.mxu0 0.0
      %1076 = vmatprep.subr.mxu0 0.0
      %1077 = vmatpush1.msra.mxu0 0.0
      %1078 = vmatprep.subr.mxu0 0.0
      %1079 = vmatpush1.msra.mxu0 0.0
      %1080 = vmatprep.subr.mxu0 0.0
      %1081 = vmatpush1.msra.mxu0 0.0
      %1082 = vmatprep.subr.mxu0 0.0
      %1083 = vmatpush1.msra.mxu0 0.0
      %1084 = vmatprep.subr.mxu0 0.0
      %1085 = vmatpush1.msra.mxu0 0.0
      %1086 = vmatprep.subr.mxu0 0.0
      %1087 = vmatpush1.msra.mxu0 0.0
      %1088 = vmatprep.subr.mxu0 0.0
      %1089 = vmatpush1.msra.mxu0 0.0
      %1090 = vmatprep.subr.mxu0 0.0
      %1091 = vmatpush1.msra.mxu0 0.0
      %1092 = vmatprep.subr.mxu0 0.0
      %1093 = vmatpush1.msra.mxu0 %v1057
      %1094 = vmatprep.subr.mxu0 0.0
      %1095 = vmatpush1.msra.mxu0 %v1056
      %1096 = vmatprep.subr.mxu0 0.0
      %1097 = vmatpush2.msra.mxu0 0.0
      %1098 = vmatprep.subr.mxu0 0.0
      %1099 = vmatpush2.msra.mxu0 0.0
      %1100 = vmatprep.subr.mxu0 0.0
      %1101 = vmatpush2.msra.mxu0 0.0
      %1102 = vmatprep.subr.mxu0 0.0
      %1103 = vmatpush2.msra.mxu0 0.0
      %1104 = vmatprep.subr.mxu0 0.0
      %1105 = vmatpush2.msra.mxu0 0.0
      %1106 = vmatprep.subr.mxu0 0.0
      %1107 = vmatpush2.msra.mxu0 0.0
      %1108 = vmatprep.subr.mxu0 0.0
      %1109 = vmatpush2.msra.mxu0 0.0
      %1110 = vmatprep.subr.mxu0 0.0
      %1111 = vmatpush2.msra.mxu0 0.0
      %1112 = vmatprep.subr.mxu0 0.0
      %1113 = vmatpush2.msra.mxu0 0.0
      %1114 = vmatprep.subr.mxu0 0.0
      %1115 = vmatpush2.msra.mxu0 0.0
      %1116 = vmatprep.subr.mxu0 0.0
      %1117 = vmatpush2.msra.mxu0 0.0
      %1118 = vmatprep.subr.mxu0 0.0
      %1119 = vmatpush2.msra.mxu0 0.0
      %1120 = vmatprep.subr.mxu0 0.0
      %1121 = vmatpush2.msra.mxu0 0.0
      %1122 = vmatprep.subr.mxu0 0.0
      %1123 = vmatpush2.msra.mxu0 0.0
      %1124 = vmatprep.subr.mxu0 0.0
      %1125 = vmatpush2.msra.mxu0 0.0
      %1126 = vmatprep.subr.mxu0 0.0
      %1127 = vmatpush2.msra.mxu0 0.0
      %1128 = vmatprep.mubr.f32.mxu0 0.0
      %1129 = vmatmul.mubr.f32.gmra.mxu0 %v1059
      %v1130 = vpop.f32.mrf.mxu0
      %v1131 = vadd.f32 0.0, %v1130
      %v1132 = vpop.f32.mrf.mxu0
      %1133 = vmatprep.mubr.f32.mxu0 0.0
      %1134 = vmatmul.mubr.f32.gmra.mxu0 %v1062
      %v1135 = vpop.f32.mrf.mxu0
      %v1136 = vadd.f32 0.0, %v1135
      %v1137 = vpop.f32.mrf.mxu0
      %1138 = vdwg.mxu0
      %v1139 = vmul.f32 %v1022, %v1131
      %v1140 = vmul.f32 %v1023, %v1136
      %v1141 = vmul.f32 %v1139, 0.2
      %v1142 = vmul.f32 %v1140, 0.2
      %v1143 = vmax.f32 %v1139, %v1141
      %v1144 = vmax.f32 %v1140, %v1142
      %v1145 = vld [vmem:[%s7] sm:$0xff]
      %v1146 = vld [vmem:[%s7 + $0x8] sm:$0xff]
      %v1147 = vld [vmem:[%s7 + $0x10] sm:$0xff]
      %v1148 = vld [vmem:[%s7 + $0x18] sm:$0xff]
      %v1149 = vld [vmem:[%s7 + $0x20] sm:$0xff]
      %v1150 = vld [vmem:[%s7 + $0x28] sm:$0xff]
      %v1151 = vld [vmem:[%s7 + $0x30] sm:$0xff]
      %v1152 = vld [vmem:[%s7 + $0x38] sm:$0xff]
      %v1153 = vld [vmem:[%s7 + $0x40] sm:$0xff]
      %v1154 = vld [vmem:[%s7 + $0x48] sm:$0xff]
      %v1155 = vld [vmem:[%s7 + $0x50] sm:$0xff]
      %v1156 = vld [vmem:[%s7 + $0x58] sm:$0xff]
      %v1157 = vld [vmem:[%s7 + $0x60] sm:$0xff]
      %v1158 = vld [vmem:[%s7 + $0x68] sm:$0xff]
      %v1159 = vld [vmem:[%s7 + $0x70] sm:$0xff]
      %v1160 = vld [vmem:[%s7 + $0x78] sm:$0xff]
      %v1162 = vsel %vm801, %v1143, 0
      %v1165 = vsel %vm801, %v1144, 0
      %1167 = vmatprep.subr.mxu0 0.0
      %1168 = vmatpush1.msra.mxu0 0.0
      %1169 = vmatprep.subr.mxu0 0.0
      %1170 = vmatpush1.msra.mxu0 0.0
      %1171 = vmatprep.subr.mxu0 0.0
      %1172 = vmatpush1.msra.mxu0 0.0
      %1173 = vmatprep.subr.mxu0 0.0
      %1174 = vmatpush1.msra.mxu0 0.0
      %1175 = vmatprep.subr.mxu0 0.0
      %1176 = vmatpush1.msra.mxu0 0.0
      %1177 = vmatprep.subr.mxu0 0.0
      %1178 = vmatpush1.msra.mxu0 0.0
      %1179 = vmatprep.subr.mxu0 0.0
      %1180 = vmatpush1.msra.mxu0 0.0
      %1181 = vmatprep.subr.mxu0 0.0
      %1182 = vmatpush1.msra.mxu0 0.0
      %1183 = vmatprep.subr.mxu0 %v1160
      %1184 = vmatpush1.msra.mxu0 %v1159
      %1185 = vmatprep.subr.mxu0 %v1158
      %1186 = vmatpush1.msra.mxu0 %v1157
      %1187 = vmatprep.subr.mxu0 %v1156
      %1188 = vmatpush1.msra.mxu0 %v1155
      %1189 = vmatprep.subr.mxu0 %v1154
      %1190 = vmatpush1.msra.mxu0 %v1153
      %1191 = vmatprep.subr.mxu0 %v1152
      %1192 = vmatpush1.msra.mxu0 %v1151
      %1193 = vmatprep.subr.mxu0 %v1150
      %1194 = vmatpush1.msra.mxu0 %v1149
      %1195 = vmatprep.subr.mxu0 %v1148
      %1196 = vmatpush1.msra.mxu0 %v1147
      %1197 = vmatprep.subr.mxu0 %v1146
      %1198 = vmatpush1.msra.mxu0 %v1145
      %1199 = vmatprep.subr.mxu0 0.0
      %1200 = vmatpush2.msra.mxu0 0.0
      %1201 = vmatprep.subr.mxu0 0.0
      %1202 = vmatpush2.msra.mxu0 0.0
      %1203 = vmatprep.subr.mxu0 0.0
      %1204 = vmatpush2.msra.mxu0 0.0
      %1205 = vmatprep.subr.mxu0 0.0
      %1206 = vmatpush2.msra.mxu0 0.0
      %1207 = vmatprep.subr.mxu0 0.0
      %1208 = vmatpush2.msra.mxu0 0.0
      %1209 = vmatprep.subr.mxu0 0.0
      %1210 = vmatpush2.msra.mxu0 0.0
      %1211 = vmatprep.subr.mxu0 0.0
      %1212 = vmatpush2.msra.mxu0 0.0
      %1213 = vmatprep.subr.mxu0 0.0
      %1214 = vmatpush2.msra.mxu0 0.0
      %1215 = vmatprep.subr.mxu0 0.0
      %1216 = vmatpush2.msra.mxu0 0.0
      %1217 = vmatprep.subr.mxu0 0.0
      %1218 = vmatpush2.msra.mxu0 0.0
      %1219 = vmatprep.subr.mxu0 0.0
      %1220 = vmatpush2.msra.mxu0 0.0
      %1221 = vmatprep.subr.mxu0 0.0
      %1222 = vmatpush2.msra.mxu0 0.0
      %1223 = vmatprep.subr.mxu0 0.0
      %1224 = vmatpush2.msra.mxu0 0.0
      %1225 = vmatprep.subr.mxu0 0.0
      %1226 = vmatpush2.msra.mxu0 0.0
      %1227 = vmatprep.subr.mxu0 0.0
      %1228 = vmatpush2.msra.mxu0 0.0
      %1229 = vmatprep.subr.mxu0 0.0
      %1230 = vmatpush2.msra.mxu0 0.0
      %1231 = vmatprep.mubr.f32.mxu0 0.0
      %1232 = vmatmul.mubr.f32.gmra.mxu0 %v1162
      %v1233 = vpop.f32.mrf.mxu0
      %v1234 = vadd.f32 0.0, %v1233
      %v1235 = vpop.f32.mrf.mxu0
      %v1236 = vadd.f32 0.0, %v1235
      %1237 = vmatprep.mubr.f32.mxu0 0.0
      %1238 = vmatmul.mubr.f32.gmra.mxu0 %v1165
      %v1239 = vpop.f32.mrf.mxu0
      %v1240 = vadd.f32 0.0, %v1239
      %v1241 = vpop.f32.mrf.mxu0
      %v1242 = vadd.f32 0.0, %v1241
      %1243 = vdwg.mxu0
      %v1244 = vmul.f32 %v1234, 0.2
      %v1245 = vmul.f32 %v1236, 0.2
      %v1246 = vmul.f32 %v1240, 0.2
      %v1247 = vmul.f32 %v1242, 0.2
      %v1248 = vmax.f32 %v1234, %v1244
      %v1249 = vmax.f32 %v1236, %v1245
      %v1250 = vmax.f32 %v1240, %v1246
      %v1251 = vmax.f32 %v1242, %v1247
      %1252 = vmatprep.subr.mxu0 0.0
      %1253 = vmatpush1.xpose.msra.mxu0 0.0
      %1254 = vmatprep.subr.mxu0 0.0
      %1255 = vmatpush1.xpose.msra.mxu0 0.0
      %1256 = vmatprep.subr.mxu0 0.0
      %1257 = vmatpush1.xpose.msra.mxu0 0.0
      %1258 = vmatprep.subr.mxu0 0.0
      %1259 = vmatpush1.xpose.msra.mxu0 0.0
      %1260 = vmatprep.subr.mxu0 0.0
      %1261 = vmatpush1.xpose.msra.mxu0 0.0
      %1262 = vmatprep.subr.mxu0 0.0
      %1263 = vmatpush1.xpose.msra.mxu0 0.0
      %1264 = vmatprep.subr.mxu0 0.0
      %1265 = vmatpush1.xpose.msra.mxu0 0.0
      %1266 = vmatprep.subr.mxu0 0.0
      %1267 = vmatpush1.xpose.msra.mxu0 0.0
      %1268 = vmatprep.subr.mxu0 0.0
      %1269 = vmatpush1.xpose.msra.mxu0 0.0
      %1270 = vmatprep.subr.mxu0 0.0
      %1271 = vmatpush1.xpose.msra.mxu0 0.0
      %1272 = vmatprep.subr.mxu0 0.0
      %1273 = vmatpush1.xpose.msra.mxu0 0.0
      %1274 = vmatprep.subr.mxu0 0.0
      %1275 = vmatpush1.xpose.msra.mxu0 0.0
      %1276 = vmatprep.subr.mxu0 0.0
      %1277 = vmatpush1.xpose.msra.mxu0 0.0
      %1278 = vmatprep.subr.mxu0 0.0
      %1279 = vmatpush1.xpose.msra.mxu0 0.0
      %1280 = vmatprep.subr.mxu0 %v1251
      %1281 = vmatpush1.xpose.msra.mxu0 %v1250
      %1282 = vmatprep.subr.mxu0 %v1249
      %1283 = vmatpush1.xpose.msra.mxu0 %v1248
      %1284 = vmatprep.subr.mxu0 0.0
      %1285 = vmatpush2.xpose.msra.mxu0 0.0
      %1286 = vmatprep.subr.mxu0 0.0
      %1287 = vmatpush2.xpose.msra.mxu0 0.0
      %1288 = vmatprep.subr.mxu0 0.0
      %1289 = vmatpush2.xpose.msra.mxu0 0.0
      %1290 = vmatprep.subr.mxu0 0.0
      %1291 = vmatpush2.xpose.msra.mxu0 0.0
      %1292 = vmatprep.subr.mxu0 0.0
      %1293 = vmatpush2.xpose.msra.mxu0 0.0
      %1294 = vmatprep.subr.mxu0 0.0
      %1295 = vmatpush2.xpose.msra.mxu0 0.0
      %1296 = vmatprep.subr.mxu0 0.0
      %1297 = vmatpush2.xpose.msra.mxu0 0.0
      %1298 = vmatprep.subr.mxu0 0.0
      %1299 = vmatpush2.xpose.msra.mxu0 0.0
      %1300 = vmatprep.subr.mxu0 0.0
      %1301 = vmatpush2.xpose.msra.mxu0 0.0
      %1302 = vmatprep.subr.mxu0 0.0
      %1303 = vmatpush2.xpose.msra.mxu0 0.0
      %1304 = vmatprep.subr.mxu0 0.0
      %1305 = vmatpush2.xpose.msra.mxu0 0.0
      %1306 = vmatprep.subr.mxu0 0.0
      %1307 = vmatpush2.xpose.msra.mxu0 0.0
      %1308 = vmatprep.subr.mxu0 0.0
      %1309 = vmatpush2.xpose.msra.mxu0 0.0
      %1310 = vmatprep.subr.mxu0 0.0
      %1311 = vmatpush2.xpose.msra.mxu0 0.0
      %1312 = vmatprep.subr.mxu0 0.0
      %1313 = vmatpush2.xpose.msra.mxu0 0.0
      %1314 = vmatprep.subr.mxu0 0.0
      %1315 = vmatpush2.xpose.msra.mxu0 0.0
      %1316 = vmatprep.mubr.f32.mxu0 %v452
      %1317 = vmatmul.mubr.f32.gmra.mxu0 %v451
      %v1318 = vpop.f32.mrf.mxu0
      %v1319 = vadd.f32 0.0, %v1318
      %v1320 = vpop.f32.mrf.mxu0
      %1321 = vdwg.mxu0
      %v1322 = vmul.f32 %v1319, 0.00390625
      %v1324 = vsel %vm663, %v553, 0
      %1326 = vmatprep.subr.mxu0 0.0
      %1327 = vmatpush1.msra.mxu0 0.0
      %1328 = vmatprep.subr.mxu0 0.0
      %1329 = vmatpush1.msra.mxu0 0.0
      %1330 = vmatprep.subr.mxu0 0.0
      %1331 = vmatpush1.msra.mxu0 0.0
      %1332 = vmatprep.subr.mxu0 0.0
      %1333 = vmatpush1.msra.mxu0 0.0
      %1334 = vmatprep.subr.mxu0 0.0
      %1335 = vmatpush1.msra.mxu0 0.0
      %1336 = vmatprep.subr.mxu0 0.0
      %1337 = vmatpush1.msra.mxu0 0.0
      %1338 = vmatprep.subr.mxu0 0.0
      %1339 = vmatpush1.msra.mxu0 0.0
      %1340 = vmatprep.subr.mxu0 0.0
      %1341 = vmatpush1.msra.mxu0 0.0
      %1342 = vmatprep.subr.mxu0 0.0
      %1343 = vmatpush1.msra.mxu0 0.0
      %1344 = vmatprep.subr.mxu0 0.0
      %1345 = vmatpush1.msra.mxu0 0.0
      %1346 = vmatprep.subr.mxu0 0.0
      %1347 = vmatpush1.msra.mxu0 0.0
      %1348 = vmatprep.subr.mxu0 0.0
      %1349 = vmatpush1.msra.mxu0 0.0
      %1350 = vmatprep.subr.mxu0 0.0
      %1351 = vmatpush1.msra.mxu0 0.0
      %1352 = vmatprep.subr.mxu0 0.0
      %1353 = vmatpush1.msra.mxu0 0.0
      %1354 = vmatprep.subr.mxu0 0.0
      %1355 = vmatpush1.msra.mxu0 %v1015
      %1356 = vmatprep.subr.mxu0 0.0
      %1357 = vmatpush1.msra.mxu0 %v1013
      %1358 = vmatprep.subr.mxu0 0.0
      %1359 = vmatpush2.msra.mxu0 0.0
      %1360 = vmatprep.subr.mxu0 0.0
      %1361 = vmatpush2.msra.mxu0 0.0
      %1362 = vmatprep.subr.mxu0 0.0
      %1363 = vmatpush2.msra.mxu0 0.0
      %1364 = vmatprep.subr.mxu0 0.0
      %1365 = vmatpush2.msra.mxu0 0.0
      %1366 = vmatprep.subr.mxu0 0.0
      %1367 = vmatpush2.msra.mxu0 0.0
      %1368 = vmatprep.subr.mxu0 0.0
      %1369 = vmatpush2.msra.mxu0 0.0
      %1370 = vmatprep.subr.mxu0 0.0
      %1371 = vmatpush2.msra.mxu0 0.0
      %1372 = vmatprep.subr.mxu0 0.0
      %1373 = vmatpush2.msra.mxu0 0.0
      %1374 = vmatprep.subr.mxu0 0.0
      %1375 = vmatpush2.msra.mxu0 0.0
      %1376 = vmatprep.subr.mxu0 0.0
      %1377 = vmatpush2.msra.mxu0 0.0
      %1378 = vmatprep.subr.mxu0 0.0
      %1379 = vmatpush2.msra.mxu0 0.0
      %1380 = vmatprep.subr.mxu0 0.0
      %1381 = vmatpush2.msra.mxu0 0.0
      %1382 = vmatprep.subr.mxu0 0.0
      %1383 = vmatpush2.msra.mxu0 0.0
      %1384 = vmatprep.subr.mxu0 0.0
      %1385 = vmatpush2.msra.mxu0 0.0
      %1386 = vmatprep.subr.mxu0 0.0
      %1387 = vmatpush2.msra.mxu0 0.0
      %1388 = vmatprep.subr.mxu0 0.0
      %1389 = vmatpush2.msra.mxu0 0.0
      %1390 = vmatprep.mubr.f32.mxu0 0.0
      %1391 = vmatmul.mubr.f32.gmra.mxu0 %v1324
      %v1392 = vpop.f32.mrf.mxu0
      %v1393 = vadd.f32 0.0, %v1392
      %v1394 = vpop.f32.mrf.mxu0
      %1395 = vdwg.mxu0
      %v1396 = vmul.f32 %v1393, 0.0625
      %v1397 = vsub.f32 %v553, %v1396
      %v1398 = vmul.f32 %v1397, %v1397
      %vm1399 = vcmask 122880
      %v1400 = vsel %vm1399, %v1398, 0.0
      %1401 = vadd.xlane.f32.xlu0 %v1400
      %v1402 = vpop.xlane.xlu0 %1401
      %v1403 = vrsqrt.pop %v1402
      %v1404 = vmul.f32 %v1402, %v1403
      %vm1405 = vcmp.eq.f32.partialorder %v1402, inf
      %v1406 = vsel %vm1405, %v1402, %v1404
      %vm1407 = vcmp.eq.f32.partialorder %v1402, 0.0
      %v1408 = vand.u32 %v1402, 2147483648
      %v1409 = vsel %vm1407, %v1408, %v1406
      %v1410 = vsub.f32 %v1013, %v661
      %v1411 = vsub.f32 %v1015, %v662
      %v1412 = vmul.f32 %v1410, %v1410
      %v1413 = vmul.f32 %v1411, %v1411
      %v1414 = vsel %vm663, %v1412, 0.0
      %1415 = vadd.xlane.f32.xlu0 %v1414
      %v1416 = vpop.xlane.xlu0 %1415
      %v1417 = vsel %vm663, %v1413, 0.0
      %1418 = vadd.xlane.f32.xlu0 %v1417
      %v1419 = vpop.xlane.xlu0 %1418
      %v1420 = vadd.f32 %v1416, %v1419
      %v1421 = vrot.slane %v1420, 4
      %v1422 = vadd.f32 %v1420, %v1421
      %v1423 = vrot.slane %v1422, 2
      %v1424 = vadd.f32 %v1422, %v1423
      %v1425 = vrot.slane %v1424, 1
      %v1426 = vadd.f32 %v1424, %v1425
      %v1427 = vrsqrt.pop %v1426
      %v1428 = vmul.f32 %v1426, %v1427
      %vm1429 = vcmp.eq.f32.partialorder %v1426, inf
      %v1430 = vsel %vm1429, %v1426, %v1428
      %vm1431 = vcmp.eq.f32.partialorder %v1426, 0.0
      %v1432 = vand.u32 %v1426, 2147483648
      %v1433 = vsel %vm1431, %v1432, %v1430
      %v1434 = vlaneseq
      %v1435 = vand.u32 %v1434, 127
      %vm1436 = vcmp.eq.s32.totalorder %v1435, 0
      %v1437 = vsel %vm1436, %v1409, 0.0
      %vm1438 = vcmp.eq.s32.totalorder %v1435, 1
      %v1439 = vsel %vm1438, %v1433, 0.0
      %v1440 = vadd.f32 %v1437, %v1439
      %v1442 = vrot.slane %v1322, 7
      %v1445 = vrot.slane %v1440, 6
      %vm1447 = vcmask 1040384
      %v1448 = vsel %vm1447, %v553, %v1442
      %vm1449 = vcmask 1041408
      %v1450 = vsel %vm1449, %v1448, %v1445
      %vm1451 = vcmask 124928
      %1452 = vst.msk [vmem:[%s431] sm:$0x7] %vm1451, %v1450
      %p1453 = scmp.lt.s32.totalorder %s23, 1
      %s1454 = scalar_select %p1453, %s23, 1
      %s1455 = smul.addr %s1454, 4
      %s1456 = scalar_lea.vmem %s12, %s1455
      // Predicated region
      $region69: #{tpu_custom_call.1} parent=67 // pred_check
        %p1457 = pneg %p303
      $region70: #{tpu_custom_call.1} parent=67 // pred_check_branch
        %1459 = sbr.rel (%p1457) target = $region72
      $region71: #{tpu_custom_call.1} parent=67 // pred_region
        _
      $region72: #{tpu_custom_call.1} parent=67 // pred_fallthru
        _
    $region68: #{tpu_custom_call.1} parent=5 // pred_fallthru
      _
    %p1460 = scmp.le.s32.totalorder 2, %s18
    // Predicated region
    $region73: #{tpu_custom_call.1} parent=5 // pred_check
      %p1461 = pneg %p1460
    $region74: #{tpu_custom_call.1} parent=5 // pred_check_branch
      %1463 = sbr.rel (%p1461) target = $region76
    $region75: #{tpu_custom_call.1} parent=5 // pred_region
      %s1464 = ssub.s32 %s18, 2
      // Predicated region
      $region77: #{tpu_custom_call.1} parent=75 // pred_check
        %p1465 = pneg %p309
      $region78: #{tpu_custom_call.1} parent=75 // pred_check_branch
        %1467 = sbr.rel (%p1465) target = $region80
      $region79: #{tpu_custom_call.1} parent=75 // pred_region
        %p1468 = scmp.lt.s32.totalorder %s24, 1
        %s1469 = scalar_select %p1468, %s24, 1
        %s1470 = smul.addr %s1469, 4
        %s1471 = scalar_lea.vmem %s12, %s1470
      $region80: #{tpu_custom_call.1} parent=75 // pred_fallthru
        _
    $region76: #{tpu_custom_call.1} parent=5 // pred_fallthru
      _
  $region6: #{tpu_custom_call.1} parent=0 // loop_footer
    %s22 = sadd.s32 1, %s18
  $region7: #{tpu_custom_call.1} parent=0 // loop_footer_branch
    %17 = sbr.rel target = $region3
  $region8: #{tpu_custom_call.1} parent=0 // loop_exit
    _

</llo_original>
